<compile_context>
chip_gen: v6e
topology: v6e:2x2x1
jax: 0.10.0
libtpu: 0.0.40
codegen_flags: <defaults>
</compile_context>

<pallas_src>
import functools

import jax
import jax.numpy as jnp
from jax import lax
from jax.experimental import pallas as pl
from jax.experimental.pallas import tpu as pltpu

NEG_SLOPE = 0.2  # LeakyReLU slope used by SPSR conv blocks


def _concat_block_kernel(x_ref, top_ref, bot_ref, w_ref, b_ref, out_ref, xp_ref,
                         *, C, W, TL, LEAD):
    """One (batch, H-tile) grid step.

    x_ref  : (1, C, TL)    input tile, th rows spatially flattened onto lanes (TL = th*W)
    top_ref: (1, 1, C, W)  row directly above the tile (zeros for the first tile)
    bot_ref: (1, 1, C, W)  row directly below the tile (zeros for the last tile)
    w_ref  : (C, 9*C)      conv weights; column (kh*3+kw)*C + ci, row co
    b_ref  : (C, 1)        conv bias
    out_ref: (1, 2*C, TL)  [x ; leaky_relu(conv(x))] stacked on the channel axis
    xp_ref : (C, SW) VMEM  scratch holding [top | tile | bottom] contiguously on lanes
    """
    x = x_ref[0]                                        # (C, TL)

    # Passthrough half: straight lane-dense block copy (x is read from HBM only once).
    out_ref[0, :C, :] = x

    # Stage [halo row above | tile rows | halo row below] contiguously so every 3x3 tap
    # is one contiguous lane-offset slice.  LEAD keeps the big store 128-lane aligned
    # and leaves >= 1 lead/tail lane for the +/-1 column offsets.
    xp_ref[:, LEAD:LEAD + W] = top_ref[0, 0]
    xp_ref[:, LEAD + W:LEAD + W + TL] = x
    xp_ref[:, LEAD + W + TL:LEAD + 2 * W + TL] = bot_ref[0, 0]

    # Horizontal-wrap masks, built once as (1, TL) and broadcast over channels.
    col = lax.broadcasted_iota(jnp.int32, (1, TL), 1) % W
    is_left = col == 0            # kw = -1 at column 0 must read the zero border
    is_right = col == W - 1       # kw = +1 at column W-1 must read the zero border

    # 3x3 conv as 9 accumulated MXU matmuls straight from the staged tile
    # (no im2col scratch: saves 9*C*TL of VMEM store traffic).
    acc = jnp.zeros((C, TL), jnp.float32)
    for kh in range(3):
        for kw in range(3):
            start = LEAD + kh * W + (kw - 1)            # static lane offset
            tap = xp_ref[:, start:start + TL]           # (C, TL) contiguous slice
            if kw == 0:
                tap = jnp.where(is_left, 0.0, tap)
            elif kw == 2:
                tap = jnp.where(is_right, 0.0, tap)
            t = kh * 3 + kw
            acc = acc + jnp.dot(w_ref[:, t * C:(t + 1) * C], tap,
                                preferred_element_type=jnp.float32)
    acc = acc + b_ref[...]                              # (C, 1) broadcasts over lanes
    y = jnp.where(acc > 0, acc, NEG_SLOPE * acc)        # LeakyReLU(0.2)
    out_ref[0, C:, :] = y.astype(out_ref.dtype)


def _vmem_capacity_bytes():
    try:
        return int(pltpu.get_tpu_info().vmem_capacity_bytes)
    except Exception:
        return 64 * 1024 * 1024     # conservative fallback (v7x per-TensorCore VMEM)


def _pick_tile_rows(N, C, H, W, itemsize, budget_bytes, tl_cap):
    """Largest divisor th of H with th*W % 128 == 0 whose per-step footprint fits."""
    cands = [t for t in range(1, H + 1) if H % t == 0 and (t * W) % 128 == 0]
    if not cands:
        # No lane-dense row tiling exists for this (H, W); fall back to one whole image
        # per grid step (last block dim == full dim keeps the layout constraint).
        return H

    def footprint(th):
        tl = th * W
        dbuf = 2 * (C * tl + 2 * C * W + 2 * C * tl)    # double-buffered in/out blocks
        sbuf = C * (tl + 2 * W + 130) + 9 * C * C + C   # xp scratch + weights + bias
        return (dbuf + sbuf) * itemsize

    ok = [t for t in cands if t * W <= tl_cap and footprint(t) <= budget_bytes]
    if not ok:
        ok = [min(cands)]           # smallest lane-dense tile still beats whole-image OOM
    th = max(ok)
    # Keep at least 2 grid steps when possible so both v7x TensorCores get work.
    if N * (H // th) < 2:
        smaller = [t for t in ok if H // t >= 2]
        if smaller:
            th = max(smaller)
    return th


def concat_block(x_nchw, w_oihw, b):
    """x_nchw: (N, C, H, W); w_oihw: (C, C, 3, 3); b: (C,). Returns (N, 2C, H, W)."""
    N, C, H, W = x_nchw.shape
    assert w_oihw.shape == (C, C, 3, 3)
    dt = x_nchw.dtype
    itemsize = jnp.dtype(dt).itemsize

    # Generation-aware sizing (v5e/v6e: 128 MiB physical VMEM, v7x: 64 MiB per TC).
    vmem_cap = _vmem_capacity_bytes()
    vmem_limit = max(32 * 1024 * 1024, min(vmem_cap * 3 // 4, 100 * 1024 * 1024))
    tl_cap = 4096 if vmem_cap <= 64 * 1024 * 1024 else 8192
    th = _pick_tile_rows(N, C, H, W, itemsize, vmem_limit * 3 // 4, tl_cap)
    n_tiles = H // th
    TL = th * W

    # Lead so the main scratch store lands on a 128-lane boundary (and >= 1 lead lane).
    LEAD = (-W) % 128 or 128
    SW = LEAD + 2 * W + TL + 1

    # Layout-only glue in plain JAX.  No padded / stacked copy of x: the only extra HBM
    # traffic is the two 1-row halo tables (~2/th of the input).
    x_flat = x_nchw.reshape(N, C, H * W)
    if n_tiles > 1:
        top_rows = x_nchw[:, :, th - 1:H - 1:th, :]     # row i*th-1  for i = 1..T-1
        bot_rows = x_nchw[:, :, th:H:th, :]             # row (i+1)*th for i = 0..T-2
    else:
        top_rows = x_nchw[:, :, 0:0, :]
        bot_rows = x_nchw[:, :, 0:0, :]
    zrow = jnp.zeros((N, C, 1, W), dt)
    top = jnp.moveaxis(jnp.concatenate([zrow, top_rows], axis=2), 1, 2)  # (N, T, C, W)
    bot = jnp.moveaxis(jnp.concatenate([bot_rows, zrow], axis=2), 1, 2)  # (N, T, C, W)

    w2 = jnp.transpose(w_oihw, (0, 2, 3, 1)).reshape(C, 9 * C).astype(dt)  # (Cout, 9*Cin)
    b2 = b.reshape(C, 1).astype(dt)

    kernel = functools.partial(_concat_block_kernel, C=C, W=W, TL=TL, LEAD=LEAD)

    out_flat = pl.pallas_call(
        kernel,
        out_shape=jax.ShapeDtypeStruct((N, 2 * C, H * W), dt),
        grid_spec=pltpu.PrefetchScalarGridSpec(
            num_scalar_prefetch=0,
            grid=(N, n_tiles),
            in_specs=[
                pl.BlockSpec((1, C, TL), lambda n, i: (n, 0, i)),
                pl.BlockSpec((1, 1, C, W), lambda n, i: (n, i, 0, 0)),
                pl.BlockSpec((1, 1, C, W), lambda n, i: (n, i, 0, 0)),
                pl.BlockSpec((C, 9 * C), lambda n, i: (0, 0)),
                pl.BlockSpec((C, 1), lambda n, i: (0, 0)),
            ],
            out_specs=pl.BlockSpec((1, 2 * C, TL), lambda n, i: (n, 0, i)),
            scratch_shapes=[pltpu.VMEM((C, SW), dt)],
        ),
        compiler_params=pltpu.CompilerParams(
            dimension_semantics=("parallel", "parallel"),
            vmem_limit_bytes=int(vmem_limit)),
    )(x_flat, top, bot, w2, b2)

    return out_flat.reshape(N, 2 * C, H, W)


def _reference(x_nchw, w_oihw, b):
    """Pure-JAX reference mirroring the PyTorch conv-block + concat."""
    y = lax.conv_general_dilated(
        x_nchw, w_oihw, window_strides=(1, 1), padding="SAME",
        dimension_numbers=("NCHW", "OIHW", "NCHW"))
    y = y + b.reshape(1, -1, 1, 1)
    y = jnp.where(y > 0, y, NEG_SLOPE * y)
    return jnp.concatenate([x_nchw, y], axis=1)


if __name__ == "__main__":
    key = jax.random.PRNGKey(0)
    kx, kw, kb = jax.random.split(key, 3)

    N, C, H, W = 2, 4, 16, 16
    x = jax.random.normal(kx, (N, C, H, W), dtype=jnp.float32)
    w = jax.random.normal(kw, (C, C, 3, 3), dtype=jnp.float32) * 0.1
    b = jax.random.normal(kb, (C,), dtype=jnp.float32) * 0.1

    out = concat_block(x, w, b)
    jax.block_until_ready(out)

    ref = _reference(x, w, b)
    assert out.shape == (N, 2 * C, H, W), out.shape
    assert jnp.allclose(out, ref, atol=1e-4, rtol=1e-4), \
        float(jnp.max(jnp.abs(out - ref)))

    print("KERNEL_OK")
</pallas_src>

<mosaic_0001>
module attributes {stable_mosaic.version = 11 : i64} {
  func.func @_concat_block_kernel(%arg0: i32, %arg1: i32, %arg2: memref<1x4x256xf32, #tpu.memory_space<vmem>>, %arg3: memref<1x1x4x16xf32, #tpu.memory_space<vmem>>, %arg4: memref<1x1x4x16xf32, #tpu.memory_space<vmem>>, %arg5: memref<4x36xf32, #tpu.memory_space<vmem>>, %arg6: memref<4x1xf32, #tpu.memory_space<vmem>>, %arg7: memref<1x8x256xf32, #tpu.memory_space<vmem>>, %arg8: memref<4x401xf32, #tpu.memory_space<vmem>>) attributes {dimension_semantics = [#tpu.dimension_semantics<parallel>, #tpu.dimension_semantics<parallel>], iteration_bounds = array<i64: 2, 1>, scalar_prefetch = 0 : i64, scratch_operands = 1 : i64, tpu.core_type = #tpu.core_type<tc>, window_params = [{transform_indices = @transform_0, window_bounds = array<i64: 1, 4, 256>}, {transform_indices = @transform_1, window_bounds = array<i64: 1, 1, 4, 16>}, {transform_indices = @transform_2, window_bounds = array<i64: 1, 1, 4, 16>}, {pipeline_mode = #tpu.pipeline_mode<synchronous>, transform_indices = @transform_3, window_bounds = array<i64: 4, 36>}, {pipeline_mode = #tpu.pipeline_mode<synchronous>, transform_indices = @transform_4, window_bounds = array<i64: 4, 1>}, {transform_indices = @transform_5, window_bounds = array<i64: 1, 8, 256>}]} {
    %c0 = arith.constant 0 : index
    %c0_0 = arith.constant 0 : index
    %c0_1 = arith.constant 0 : index
    %0 = vector.load %arg2[%c0, %c0_0, %c0_1] : memref<1x4x256xf32, #tpu.memory_space<vmem>>, vector<1x4x256xf32>
    %1 = vector.shape_cast %0 : vector<1x4x256xf32> to vector<4x256xf32>
    %c0_2 = arith.constant 0 : index
    %c0_3 = arith.constant 0 : index
    %c0_4 = arith.constant 0 : index
    %2 = vector.load %arg7[%c0_2, %c0_3, %c0_4] : memref<1x8x256xf32, #tpu.memory_space<vmem>>, vector<1x4x256xf32>
    %3 = vector.shape_cast %2 : vector<1x4x256xf32> to vector<4x256xf32>
    %4 = vector.shape_cast %1 : vector<4x256xf32> to vector<1x4x256xf32>
    tpu.vector_store %arg7[%c0_2, %c0_3, %c0_4], %4 {strides = array<i32>} : memref<1x8x256xf32, #tpu.memory_space<vmem>>, vector<1x4x256xf32>,
    %c0_5 = arith.constant 0 : index
    %c0_6 = arith.constant 0 : index
    %c0_7 = arith.constant 0 : index
    %c0_8 = arith.constant 0 : index
    %5 = vector.load %arg3[%c0_5, %c0_6, %c0_7, %c0_8] : memref<1x1x4x16xf32, #tpu.memory_space<vmem>>, vector<1x1x4x16xf32>
    %6 = vector.shape_cast %5 : vector<1x1x4x16xf32> to vector<4x16xf32>
    %c0_9 = arith.constant 0 : index
    %c112 = arith.constant 112 : index
    %7 = vector.load %arg8[%c0_9, %c112] : memref<4x401xf32, #tpu.memory_space<vmem>>, vector<4x16xf32>
    tpu.vector_store %arg8[%c0_9, %c112], %6 {strides = array<i32>} : memref<4x401xf32, #tpu.memory_space<vmem>>, vector<4x16xf32>,
    %c0_10 = arith.constant 0 : index
    %c128 = arith.constant 128 : index
    %8 = vector.load %arg8[%c0_10, %c128] : memref<4x401xf32, #tpu.memory_space<vmem>>, vector<4x256xf32>
    tpu.vector_store %arg8[%c0_10, %c128], %1 {strides = array<i32>} : memref<4x401xf32, #tpu.memory_space<vmem>>, vector<4x256xf32>,
    %c0_11 = arith.constant 0 : index
    %c0_12 = arith.constant 0 : index
    %c0_13 = arith.constant 0 : index
    %c0_14 = arith.constant 0 : index
    %9 = vector.load %arg4[%c0_11, %c0_12, %c0_13, %c0_14] : memref<1x1x4x16xf32, #tpu.memory_space<vmem>>, vector<1x1x4x16xf32>
    %10 = vector.shape_cast %9 : vector<1x1x4x16xf32> to vector<4x16xf32>
    %c0_15 = arith.constant 0 : index
    %c384 = arith.constant 384 : index
    %11 = vector.load %arg8[%c0_15, %c384] : memref<4x401xf32, #tpu.memory_space<vmem>>, vector<4x16xf32>
    tpu.vector_store %arg8[%c0_15, %c384], %10 {strides = array<i32>} : memref<4x401xf32, #tpu.memory_space<vmem>>, vector<4x16xf32>,
    %12 = tpu.iota {dimensions = array<i32: 1>} : vector<1x256xi32>
    %c16_i32 = arith.constant 16 : i32
    %c0_i32 = arith.constant 0 : i32
    %13 = arith.cmpi eq, %c16_i32, %c0_i32 : i32
    %c1_i32 = arith.constant 1 : i32
    %14 = arith.select %13, %c1_i32, %c16_i32 : i32
    %15 = vector.broadcast %14 : i32 to vector<1x256xi32>
    %16 = arith.remsi %12, %15 : vector<1x256xi32>
    %c0_i32_16 = arith.constant 0 : i32
    %17 = vector.broadcast %c0_i32_16 : i32 to vector<1x256xi32>
    %18 = arith.cmpi ne, %16, %17 : vector<1x256xi32>
    %c0_i32_17 = arith.constant 0 : i32
    %19 = vector.broadcast %c0_i32_17 : i32 to vector<1x256xi32>
    %20 = arith.cmpi slt, %16, %19 : vector<1x256xi32>
    %c0_i32_18 = arith.constant 0 : i32
    %21 = arith.cmpi slt, %14, %c0_i32_18 : i32
    %22 = vector.broadcast %21 : i1 to vector<1x256xi1>
    %23 = vector.broadcast %22 : vector<1x256xi1> to vector<1x256xi1>
    %24 = arith.xori %20, %23 : vector<1x256xi1>
    %25 = arith.andi %24, %18 : vector<1x256xi1>
    %26 = vector.broadcast %14 : i32 to vector<1x256xi32>
    %27 = arith.addi %16, %26 : vector<1x256xi32>
    %28 = arith.select %25, %27, %16 : vector<1x256xi1>, vector<1x256xi32>
    %c0_i32_19 = arith.constant 0 : i32
    %29 = vector.broadcast %c0_i32_19 : i32 to vector<1x256xi32>
    %30 = arith.cmpi eq, %28, %29 : vector<1x256xi32>
    %c15_i32 = arith.constant 15 : i32
    %31 = vector.broadcast %c15_i32 : i32 to vector<1x256xi32>
    %32 = arith.cmpi eq, %28, %31 : vector<1x256xi32>
    %cst = arith.constant 0.000000e+00 : f32
    %33 = vector.broadcast %cst : f32 to vector<4x256xf32>
    %c0_20 = arith.constant 0 : index
    %c111 = arith.constant 111 : index
    %34 = vector.load %arg8[%c0_20, %c111] : memref<4x401xf32, #tpu.memory_space<vmem>>, vector<4x256xf32>
    %cst_21 = arith.constant 0.000000e+00 : f32
    %35 = vector.shape_cast %30 : vector<1x256xi1> to vector<1x256xi1>
    %36 = vector.broadcast %35 : vector<1x256xi1> to vector<4x256xi1>
    %37 = vector.broadcast %cst_21 : f32 to vector<4x256xf32>
    %38 = arith.select %36, %37, %34 : vector<4x256xi1>, vector<4x256xf32>
    %c0_22 = arith.constant 0 : index
    %c0_23 = arith.constant 0 : index
    %39 = vector.load %arg5[%c0_22, %c0_23] : memref<4x36xf32, #tpu.memory_space<vmem>>, vector<4x4xf32>
    %cst_24 = arith.constant dense<0.000000e+00> : vector<4x256xf32>
    %40 = tpu.matmul %39, %38, %cst_24 {dimension_numbers = #tpu.dot_dimension_numbers<[1], [0], [0], [1], [0, 0, 1, 1], [], []>} : vector<4x4xf32>, vector<4x256xf32>, vector<4x256xf32> -> vector<4x256xf32>
    %41 = arith.addf %33, %40 : vector<4x256xf32>
    %c0_25 = arith.constant 0 : index
    %c112_26 = arith.constant 112 : index
    %42 = vector.load %arg8[%c0_25, %c112_26] : memref<4x401xf32, #tpu.memory_space<vmem>>, vector<4x256xf32>
    %c0_27 = arith.constant 0 : index
    %c4 = arith.constant 4 : index
    %43 = vector.load %arg5[%c0_27, %c4] : memref<4x36xf32, #tpu.memory_space<vmem>>, vector<4x4xf32>
    %cst_28 = arith.constant dense<0.000000e+00> : vector<4x256xf32>
    %44 = tpu.matmul %43, %42, %cst_28 {dimension_numbers = #tpu.dot_dimension_numbers<[1], [0], [0], [1], [0, 0, 1, 1], [], []>} : vector<4x4xf32>, vector<4x256xf32>, vector<4x256xf32> -> vector<4x256xf32>
    %45 = arith.addf %41, %44 : vector<4x256xf32>
    %c0_29 = arith.constant 0 : index
    %c113 = arith.constant 113 : index
    %46 = vector.load %arg8[%c0_29, %c113] : memref<4x401xf32, #tpu.memory_space<vmem>>, vector<4x256xf32>
    %cst_30 = arith.constant 0.000000e+00 : f32
    %47 = vector.shape_cast %32 : vector<1x256xi1> to vector<1x256xi1>
    %48 = vector.broadcast %47 : vector<1x256xi1> to vector<4x256xi1>
    %49 = vector.broadcast %cst_30 : f32 to vector<4x256xf32>
    %50 = arith.select %48, %49, %46 : vector<4x256xi1>, vector<4x256xf32>
    %c0_31 = arith.constant 0 : index
    %c8 = arith.constant 8 : index
    %51 = vector.load %arg5[%c0_31, %c8] : memref<4x36xf32, #tpu.memory_space<vmem>>, vector<4x4xf32>
    %cst_32 = arith.constant dense<0.000000e+00> : vector<4x256xf32>
    %52 = tpu.matmul %51, %50, %cst_32 {dimension_numbers = #tpu.dot_dimension_numbers<[1], [0], [0], [1], [0, 0, 1, 1], [], []>} : vector<4x4xf32>, vector<4x256xf32>, vector<4x256xf32> -> vector<4x256xf32>
    %53 = arith.addf %45, %52 : vector<4x256xf32>
    %c0_33 = arith.constant 0 : index
    %c127 = arith.constant 127 : index
    %54 = vector.load %arg8[%c0_33, %c127] : memref<4x401xf32, #tpu.memory_space<vmem>>, vector<4x256xf32>
    %cst_34 = arith.constant 0.000000e+00 : f32
    %55 = vector.shape_cast %30 : vector<1x256xi1> to vector<1x256xi1>
    %56 = vector.broadcast %55 : vector<1x256xi1> to vector<4x256xi1>
    %57 = vector.broadcast %cst_34 : f32 to vector<4x256xf32>
    %58 = arith.select %56, %57, %54 : vector<4x256xi1>, vector<4x256xf32>
    %c0_35 = arith.constant 0 : index
    %c12 = arith.constant 12 : index
    %59 = vector.load %arg5[%c0_35, %c12] : memref<4x36xf32, #tpu.memory_space<vmem>>, vector<4x4xf32>
    %cst_36 = arith.constant dense<0.000000e+00> : vector<4x256xf32>
    %60 = tpu.matmul %59, %58, %cst_36 {dimension_numbers = #tpu.dot_dimension_numbers<[1], [0], [0], [1], [0, 0, 1, 1], [], []>} : vector<4x4xf32>, vector<4x256xf32>, vector<4x256xf32> -> vector<4x256xf32>
    %61 = arith.addf %53, %60 : vector<4x256xf32>
    %c0_37 = arith.constant 0 : index
    %c128_38 = arith.constant 128 : index
    %62 = vector.load %arg8[%c0_37, %c128_38] : memref<4x401xf32, #tpu.memory_space<vmem>>, vector<4x256xf32>
    %c0_39 = arith.constant 0 : index
    %c16 = arith.constant 16 : index
    %63 = vector.load %arg5[%c0_39, %c16] : memref<4x36xf32, #tpu.memory_space<vmem>>, vector<4x4xf32>
    %cst_40 = arith.constant dense<0.000000e+00> : vector<4x256xf32>
    %64 = tpu.matmul %63, %62, %cst_40 {dimension_numbers = #tpu.dot_dimension_numbers<[1], [0], [0], [1], [0, 0, 1, 1], [], []>} : vector<4x4xf32>, vector<4x256xf32>, vector<4x256xf32> -> vector<4x256xf32>
    %65 = arith.addf %61, %64 : vector<4x256xf32>
    %c0_41 = arith.constant 0 : index
    %c129 = arith.constant 129 : index
    %66 = vector.load %arg8[%c0_41, %c129] : memref<4x401xf32, #tpu.memory_space<vmem>>, vector<4x256xf32>
    %cst_42 = arith.constant 0.000000e+00 : f32
    %67 = vector.shape_cast %32 : vector<1x256xi1> to vector<1x256xi1>
    %68 = vector.broadcast %67 : vector<1x256xi1> to vector<4x256xi1>
    %69 = vector.broadcast %cst_42 : f32 to vector<4x256xf32>
    %70 = arith.select %68, %69, %66 : vector<4x256xi1>, vector<4x256xf32>
    %c0_43 = arith.constant 0 : index
    %c20 = arith.constant 20 : index
    %71 = vector.load %arg5[%c0_43, %c20] : memref<4x36xf32, #tpu.memory_space<vmem>>, vector<4x4xf32>
    %cst_44 = arith.constant dense<0.000000e+00> : vector<4x256xf32>
    %72 = tpu.matmul %71, %70, %cst_44 {dimension_numbers = #tpu.dot_dimension_numbers<[1], [0], [0], [1], [0, 0, 1, 1], [], []>} : vector<4x4xf32>, vector<4x256xf32>, vector<4x256xf32> -> vector<4x256xf32>
    %73 = arith.addf %65, %72 : vector<4x256xf32>
    %c0_45 = arith.constant 0 : index
    %c143 = arith.constant 143 : index
    %74 = vector.load %arg8[%c0_45, %c143] : memref<4x401xf32, #tpu.memory_space<vmem>>, vector<4x256xf32>
    %cst_46 = arith.constant 0.000000e+00 : f32
    %75 = vector.shape_cast %30 : vector<1x256xi1> to vector<1x256xi1>
    %76 = vector.broadcast %75 : vector<1x256xi1> to vector<4x256xi1>
    %77 = vector.broadcast %cst_46 : f32 to vector<4x256xf32>
    %78 = arith.select %76, %77, %74 : vector<4x256xi1>, vector<4x256xf32>
    %c0_47 = arith.constant 0 : index
    %c24 = arith.constant 24 : index
    %79 = vector.load %arg5[%c0_47, %c24] : memref<4x36xf32, #tpu.memory_space<vmem>>, vector<4x4xf32>
    %cst_48 = arith.constant dense<0.000000e+00> : vector<4x256xf32>
    %80 = tpu.matmul %79, %78, %cst_48 {dimension_numbers = #tpu.dot_dimension_numbers<[1], [0], [0], [1], [0, 0, 1, 1], [], []>} : vector<4x4xf32>, vector<4x256xf32>, vector<4x256xf32> -> vector<4x256xf32>
    %81 = arith.addf %73, %80 : vector<4x256xf32>
    %c0_49 = arith.constant 0 : index
    %c144 = arith.constant 144 : index
    %82 = vector.load %arg8[%c0_49, %c144] : memref<4x401xf32, #tpu.memory_space<vmem>>, vector<4x256xf32>
    %c0_50 = arith.constant 0 : index
    %c28 = arith.constant 28 : index
    %83 = vector.load %arg5[%c0_50, %c28] : memref<4x36xf32, #tpu.memory_space<vmem>>, vector<4x4xf32>
    %cst_51 = arith.constant dense<0.000000e+00> : vector<4x256xf32>
    %84 = tpu.matmul %83, %82, %cst_51 {dimension_numbers = #tpu.dot_dimension_numbers<[1], [0], [0], [1], [0, 0, 1, 1], [], []>} : vector<4x4xf32>, vector<4x256xf32>, vector<4x256xf32> -> vector<4x256xf32>
    %85 = arith.addf %81, %84 : vector<4x256xf32>
    %c0_52 = arith.constant 0 : index
    %c145 = arith.constant 145 : index
    %86 = vector.load %arg8[%c0_52, %c145] : memref<4x401xf32, #tpu.memory_space<vmem>>, vector<4x256xf32>
    %cst_53 = arith.constant 0.000000e+00 : f32
    %87 = vector.shape_cast %32 : vector<1x256xi1> to vector<1x256xi1>
    %88 = vector.broadcast %87 : vector<1x256xi1> to vector<4x256xi1>
    %89 = vector.broadcast %cst_53 : f32 to vector<4x256xf32>
    %90 = arith.select %88, %89, %86 : vector<4x256xi1>, vector<4x256xf32>
    %c0_54 = arith.constant 0 : index
    %c32 = arith.constant 32 : index
    %91 = vector.load %arg5[%c0_54, %c32] : memref<4x36xf32, #tpu.memory_space<vmem>>, vector<4x4xf32>
    %cst_55 = arith.constant dense<0.000000e+00> : vector<4x256xf32>
    %92 = tpu.matmul %91, %90, %cst_55 {dimension_numbers = #tpu.dot_dimension_numbers<[1], [0], [0], [1], [0, 0, 1, 1], [], []>} : vector<4x4xf32>, vector<4x256xf32>, vector<4x256xf32> -> vector<4x256xf32>
    %93 = arith.addf %85, %92 : vector<4x256xf32>
    %c0_56 = arith.constant 0 : index
    %c0_57 = arith.constant 0 : index
    %94 = vector.load %arg6[%c0_56, %c0_57] : memref<4x1xf32, #tpu.memory_space<vmem>>, vector<4x1xf32>
    %95 = vector.broadcast %94 : vector<4x1xf32> to vector<4x256xf32>
    %96 = arith.addf %93, %95 : vector<4x256xf32>
    %cst_58 = arith.constant 0.000000e+00 : f32
    %97 = vector.broadcast %cst_58 : f32 to vector<4x256xf32>
    %98 = arith.cmpf ogt, %96, %97 : vector<4x256xf32>
    %cst_59 = arith.constant 2.000000e-01 : f32
    %99 = vector.broadcast %cst_59 : f32 to vector<4x256xf32>
    %100 = arith.mulf %99, %96 : vector<4x256xf32>
    %101 = arith.select %98, %96, %100 : vector<4x256xi1>, vector<4x256xf32>
    %c0_60 = arith.constant 0 : index
    %c4_61 = arith.constant 4 : index
    %c0_62 = arith.constant 0 : index
    %102 = vector.load %arg7[%c0_60, %c4_61, %c0_62] : memref<1x8x256xf32, #tpu.memory_space<vmem>>, vector<1x4x256xf32>
    %103 = vector.shape_cast %102 : vector<1x4x256xf32> to vector<4x256xf32>
    %104 = vector.shape_cast %101 : vector<4x256xf32> to vector<1x4x256xf32>
    tpu.vector_store %arg7[%c0_60, %c4_61, %c0_62], %104 {strides = array<i32>} : memref<1x8x256xf32, #tpu.memory_space<vmem>>, vector<1x4x256xf32>,
    return
  }
  func.func @transform_0(%arg0: i32, %arg1: i32) -> (i32, i32, i32) {
    %c0_i32 = arith.constant 0 : i32
    %c0_i32_0 = arith.constant 0 : i32
    return %arg0, %c0_i32, %arg1 : i32, i32, i32
  }
  func.func @transform_1(%arg0: i32, %arg1: i32) -> (i32, i32, i32, i32) {
    %c0_i32 = arith.constant 0 : i32
    %c0_i32_0 = arith.constant 0 : i32
    %c0_i32_1 = arith.constant 0 : i32
    return %arg0, %arg1, %c0_i32, %c0_i32_0 : i32, i32, i32, i32
  }
  func.func @transform_2(%arg0: i32, %arg1: i32) -> (i32, i32, i32, i32) {
    %c0_i32 = arith.constant 0 : i32
    %c0_i32_0 = arith.constant 0 : i32
    %c0_i32_1 = arith.constant 0 : i32
    return %arg0, %arg1, %c0_i32, %c0_i32_0 : i32, i32, i32, i32
  }
  func.func @transform_3(%arg0: i32, %arg1: i32) -> (i32, i32) {
    %c0_i32 = arith.constant 0 : i32
    %c0_i32_0 = arith.constant 0 : i32
    %c0_i32_1 = arith.constant 0 : i32
    return %c0_i32, %c0_i32_0 : i32, i32
  }
  func.func @transform_4(%arg0: i32, %arg1: i32) -> (i32, i32) {
    %c0_i32 = arith.constant 0 : i32
    %c0_i32_0 = arith.constant 0 : i32
    %c0_i32_1 = arith.constant 0 : i32
    return %c0_i32, %c0_i32_0 : i32, i32
  }
  func.func @transform_5(%arg0: i32, %arg1: i32) -> (i32, i32, i32) {
    %c0_i32 = arith.constant 0 : i32
    %c0_i32_0 = arith.constant 0 : i32
    return %arg0, %c0_i32, %arg1 : i32, i32, i32
  }
}

</mosaic_0001>

<llo_original>
// kernel: tpu_custom_call.1
$region0: #{tpu_custom_call.1}
  #allocation0 [shape = 'u32[]', space=smem, size = 0x4, offset = 0x4, fixed_abs, tag = 'smem constant byte address 0x4 - core index']
  #allocation1 [shape = 'u32[144,128]{1,0:T(1,128)}', space=vmem, size = 0x12000, scoped, tag = 'internal scratch']
  #allocation2 [shape = 'f32[4,401]{1,0:T(4,128)}', space=vmem, size = 0x2000, scoped, tag = 'scratch operand']
  %s0 = inlined_call_operand.hbm [shape: f32[2,4,256], index: 0, kind: input, shape index: {}]
  %s1 = inlined_call_operand.hbm [shape: f32[2,1,4,16], index: 1, kind: input, shape index: {}]
  %s2 = inlined_call_operand.vmem [shape: f32[2,1,4,16], index: 2, kind: input, shape index: {}]
  %s3 = inlined_call_operand.hbm [shape: f32[4,36], index: 3, kind: input, shape index: {}]
  %s4 = inlined_call_operand.vmem [shape: f32[4,1], index: 4, kind: input, shape index: {}]
  %s5 = inlined_call_operand.hbm [shape: f32[2,8,256], index: 5, kind: output, shape index: {}]
  %s6 = sld [smem:[#allocation0]]
  $region65: #{tpu_custom_call.1} parent=0
    _
  %s8 = ssub.s32 1, %s6
  %s9 = scalar_select 0, %s8, %s6
  $region1: #{tpu_custom_call.1} parent=0
    #allocation3 [shape = 'u8[8192]{0}', space=vmem, size = 0x2000, scoped, tag = 'input window, operand 0']
    #allocation4 [shape = 's32[2]{0}', space=sflag, size = 0x8, scoped, tag = 'scoped memory for tpu_custom_call.1']
    #allocation5 [shape = 's32[2]{0}', space=sflag, size = 0x8, scoped, tag = 'scoped memory for tpu_custom_call.1']
    #allocation6 [shape = 'u8[4096]{0}', space=vmem, size = 0x1000, scoped, tag = 'input window, operand 1']
    #allocation7 [shape = 's32[2]{0}', space=sflag, size = 0x8, scoped, tag = 'scoped memory for tpu_custom_call.1']
    #allocation8 [shape = 'u8[2048]{0}', space=vmem, size = 0x800, scoped, tag = 'input window, operand 3, single buffered']
    #allocation9 [shape = 'u8[16384]{0}', space=vmem, size = 0x4000, scoped, tag = 'output window, operand 0']
    %10 = vsyncpa [#allocation4], 0
    %s11 = scalar_lea.sflag [#allocation4], 1
    %12 = vsyncpa %s11, 0
    %13 = vsyncpa [#allocation7], 0
    %s14 = scalar_lea.sflag [#allocation7], 1
    %15 = vsyncpa %s14, 0
    %16 = vsyncpa [#allocation5], 0
    %s17 = scalar_lea.sflag [#allocation5], 1
    %18 = vsyncpa %s17, 0
    loop: start=0, step=1, limit=4
    $region2: #{tpu_custom_call.1} parent=1 // loop_pre_header
      _
    $region3: #{tpu_custom_call.1} parent=1 // loop_header
      %s20 = sphi 0, %s24
      %p21 = scmp.ge.s32.totalorder %s20, 4
      %s27 = sphi 0, %s39
      %s28 = sphi 0, %s35
      %s29 = sphi 0, %s27
      %s30 = sphi 0, %s28
      %s31 = sphi 0, %s29
      %s32 = sphi 0, %s30
      %s44 = sphi 0, %s46
      %s47 = sphi 0, %s44
      %s48 = sphi 0, %s47
      %s64 = sphi 0, %s48
      %s72 = sphi 0, %s74
      %s75 = sphi 0, %s72
      %s76 = sphi 0, %s75
      %s92 = sphi 0, %s76
      %s100 = sphi 0, %s102
      %s103 = sphi 0, %s100
      %s104 = sphi 0, %s103
      %s120 = sphi 0, %s104
      %s124 = sphi 0, %s124
      %s126 = sphi 0, %s124
      %s127 = sphi 0, %s126
      %s141 = sphi 0, %s127
      %s145 = sphi 0, %s145
      %s147 = sphi 0, %s145
      %s148 = sphi 0, %s147
      %s162 = sphi 0, %s148
      %s170 = sphi 0, %s172
      %s173 = sphi 0, %s170
      %s174 = sphi 0, %s173
      %s190 = sphi 0, %s174
    $region4: #{tpu_custom_call.1} parent=1 // loop_header_branch
      %23 = sbr.rel (%p21) target = $region8
    $region5: #{tpu_custom_call.1} parent=1 // loop_body
      %s25 = ssub.s32 %s20, 1
      %s26 = ssub.s32 %s20, 2
      %s33 = sadd.s32 1, %s28
      %p34 = scmp.ge.s32.totalorder %s33, 1
      %s35 = scalar_select %p34, 0, %s33
      %s36 = sadd.s32 1, %s27
      %s37 = scalar_select %p34, %s36, %s27
      %p38 = scmp.ge.s32.totalorder %s37, 2
      %s39 = scalar_select %p38, 0, %s37
      %s40 = ssub.s32 %s27, %s39
      %s41 = ssub.s32 %s28, %s35
      %s42 = sor.u32 %s40, %s41
      %p43 = scmp.eq.s32.totalorder %s42, 0
      %s45 = sadd.s32 %s44, 1
      %s46 = scalar_select %p43, %s44, %s45
      %p49 = pneg %p43
      %p50 = scmp.eq.s32.totalorder %s20, 1
      %p51 = por %p49, %p50
      %p52 = scmp.ne.s32.totalorder %s44, %s47
      %p53 = scmp.eq.s32.totalorder %s20, 0
      %p54 = por %p52, %p53
      %p55 = scmp.ne.s32.totalorder %s44, %s47
      %p56 = scmp.eq.s32.totalorder %s25, 1
      %p57 = por %p55, %p56
      %p58 = scmp.ne.s32.totalorder %s47, %s48
      %p59 = scmp.eq.s32.totalorder %s25, 0
      %p60 = por %p58, %p59
      %p61 = scmp.ne.s32.totalorder %s47, %s48
      %p62 = scmp.eq.s32.totalorder %s26, 1
      %p63 = por %p61, %p62
      %p65 = scmp.ne.s32.totalorder %s48, %s64
      %p66 = scmp.eq.s32.totalorder %s26, 0
      %p67 = por %p65, %p66
      %s68 = ssub.s32 %s27, %s39
      %s69 = ssub.s32 %s28, %s35
      %s70 = sor.u32 %s68, %s69
      %p71 = scmp.eq.s32.totalorder %s70, 0
      %s73 = sadd.s32 %s72, 1
      %s74 = scalar_select %p71, %s72, %s73
      %p77 = pneg %p71
      %p78 = scmp.eq.s32.totalorder %s20, 1
      %p79 = por %p77, %p78
      %p80 = scmp.ne.s32.totalorder %s72, %s75
      %p81 = scmp.eq.s32.totalorder %s20, 0
      %p82 = por %p80, %p81
      %p83 = scmp.ne.s32.totalorder %s72, %s75
      %p84 = scmp.eq.s32.totalorder %s25, 1
      %p85 = por %p83, %p84
      %p86 = scmp.ne.s32.totalorder %s75, %s76
      %p87 = scmp.eq.s32.totalorder %s25, 0
      %p88 = por %p86, %p87
      %p89 = scmp.ne.s32.totalorder %s75, %s76
      %p90 = scmp.eq.s32.totalorder %s26, 1
      %p91 = por %p89, %p90
      %p93 = scmp.ne.s32.totalorder %s76, %s92
      %p94 = scmp.eq.s32.totalorder %s26, 0
      %p95 = por %p93, %p94
      %s96 = ssub.s32 %s27, %s39
      %s97 = ssub.s32 %s28, %s35
      %s98 = sor.u32 %s96, %s97
      %p99 = scmp.eq.s32.totalorder %s98, 0
      %s101 = sadd.s32 %s100, 1
      %s102 = scalar_select %p99, %s100, %s101
      %p105 = pneg %p99
      %p106 = scmp.eq.s32.totalorder %s20, 1
      %p107 = por %p105, %p106
      %p108 = scmp.ne.s32.totalorder %s100, %s103
      %p109 = scmp.eq.s32.totalorder %s20, 0
      %p110 = por %p108, %p109
      %p111 = scmp.ne.s32.totalorder %s100, %s103
      %p112 = scmp.eq.s32.totalorder %s25, 1
      %p113 = por %p111, %p112
      %p114 = scmp.ne.s32.totalorder %s103, %s104
      %p115 = scmp.eq.s32.totalorder %s25, 0
      %p116 = por %p114, %p115
      %p117 = scmp.ne.s32.totalorder %s103, %s104
      %p118 = scmp.eq.s32.totalorder %s26, 1
      %p119 = por %p117, %p118
      %p121 = scmp.ne.s32.totalorder %s104, %s120
      %p122 = scmp.eq.s32.totalorder %s26, 0
      %p123 = por %p121, %p122
      %s125 = sadd.s32 %s124, 1
      %p128 = scmp.eq.s32.totalorder %s20, 1
      %p129 = scmp.ne.s32.totalorder %s124, %s126
      %p130 = scmp.eq.s32.totalorder %s20, 0
      %p131 = por %p129, %p130
      %p132 = scmp.ne.s32.totalorder %s124, %s126
      %p133 = scmp.eq.s32.totalorder %s25, 1
      %p134 = por %p132, %p133
      %p135 = scmp.ne.s32.totalorder %s126, %s127
      %p136 = scmp.eq.s32.totalorder %s25, 0
      %p137 = por %p135, %p136
      %p138 = scmp.ne.s32.totalorder %s126, %s127
      %p139 = scmp.eq.s32.totalorder %s26, 1
      %p140 = por %p138, %p139
      %p142 = scmp.ne.s32.totalorder %s127, %s141
      %p143 = scmp.eq.s32.totalorder %s26, 0
      %p144 = por %p142, %p143
      %s146 = sadd.s32 %s145, 1
      %p149 = scmp.eq.s32.totalorder %s20, 1
      %p150 = scmp.ne.s32.totalorder %s145, %s147
      %p151 = scmp.eq.s32.totalorder %s20, 0
      %p152 = por %p150, %p151
      %p153 = scmp.ne.s32.totalorder %s145, %s147
      %p154 = scmp.eq.s32.totalorder %s25, 1
      %p155 = por %p153, %p154
      %p156 = scmp.ne.s32.totalorder %s147, %s148
      %p157 = scmp.eq.s32.totalorder %s25, 0
      %p158 = por %p156, %p157
      %p159 = scmp.ne.s32.totalorder %s147, %s148
      %p160 = scmp.eq.s32.totalorder %s26, 1
      %p161 = por %p159, %p160
      %p163 = scmp.ne.s32.totalorder %s148, %s162
      %p164 = scmp.eq.s32.totalorder %s26, 0
      %p165 = por %p163, %p164
      %s166 = ssub.s32 %s27, %s39
      %s167 = ssub.s32 %s28, %s35
      %s168 = sor.u32 %s166, %s167
      %p169 = scmp.eq.s32.totalorder %s168, 0
      %s171 = sadd.s32 %s170, 1
      %s172 = scalar_select %p169, %s170, %s171
      %p175 = pneg %p169
      %p176 = scmp.eq.s32.totalorder %s20, 1
      %p177 = por %p175, %p176
      %p178 = scmp.ne.s32.totalorder %s170, %s173
      %p179 = scmp.eq.s32.totalorder %s20, 0
      %p180 = por %p178, %p179
      %p181 = scmp.ne.s32.totalorder %s170, %s173
      %p182 = scmp.eq.s32.totalorder %s25, 1
      %p183 = por %p181, %p182
      %p184 = scmp.ne.s32.totalorder %s173, %s174
      %p185 = scmp.eq.s32.totalorder %s25, 0
      %p186 = por %p184, %p185
      %p187 = scmp.ne.s32.totalorder %s173, %s174
      %p188 = scmp.eq.s32.totalorder %s26, 1
      %p189 = por %p187, %p188
      %p191 = scmp.ne.s32.totalorder %s174, %s190
      %p192 = scmp.eq.s32.totalorder %s26, 0
      %p193 = por %p191, %p192
      %p194 = scmp.le.s32.totalorder 1, %s20
      %p195 = scmp.lt.s32.totalorder %s20, 3
      %p196 = pnand %p194, %p195
      %p197 = pneg %p196
      // Predicated region
      $region9: #{tpu_custom_call.1} parent=5 // pred_check
        _
      $region10: #{tpu_custom_call.1} parent=5 // pred_check_branch
        %199 = sbr.rel (%p196) target = $region12
      $region11: #{tpu_custom_call.1} parent=5 // pred_region
        %s200 = ssub.s32 %s20, 1
        // Predicated region
        $region13: #{tpu_custom_call.1} parent=11 // pred_check
          %p201 = pneg %p137
        $region14: #{tpu_custom_call.1} parent=11 // pred_check_branch
          %203 = sbr.rel (%p201) target = $region16
        $region15: #{tpu_custom_call.1} parent=11 // pred_region
          %s205 = ssub.s32 64, 64
          %206 = vsyncadd [#allocation7], %s205
          %s208 = sshll.u32 [#allocation8], 4
          %s209 = int_to_ptr.vmem [resolvable:$true] %s208
          %211 = dma.hbm_to_vmem [thread:$0]  %s3, 64, %s209, [#allocation7]
        $region16: #{tpu_custom_call.1} parent=11 // pred_fallthru
          _
        // Predicated region
        $region17: #{tpu_custom_call.1} parent=11 // pred_check
          %p212 = pneg %p158
        $region18: #{tpu_custom_call.1} parent=11 // pred_check_branch
          %214 = sbr.rel (%p212) target = $region20
        $region19: #{tpu_custom_call.1} parent=11 // pred_region
          _
        $region20: #{tpu_custom_call.1} parent=11 // pred_fallthru
          _
      $region12: #{tpu_custom_call.1} parent=5 // pred_fallthru
        _
      %p215 = scmp.lt.s32.totalorder %s20, 2
      // Predicated region
      $region21: #{tpu_custom_call.1} parent=5 // pred_check
        %p216 = pneg %p215
      $region22: #{tpu_custom_call.1} parent=5 // pred_check_branch
        %218 = sbr.rel (%p216) target = $region24
      $region23: #{tpu_custom_call.1} parent=5 // pred_region
        // Predicated region
        $region25: #{tpu_custom_call.1} parent=23 // pred_check
          %p219 = pneg %p54
        $region26: #{tpu_custom_call.1} parent=23 // pred_check_branch
          %221 = sbr.rel (%p219) target = $region28
        $region27: #{tpu_custom_call.1} parent=23 // pred_region
          %s222 = sand.u32 %s44, 1
          %s223 = scalar_lea.sflag [#allocation4], %s222
          %s224 = sand.u32 %s44, 1
          %s225 = smul.addr %s224, 8
          %s226 = scalar_lea.vmem [#allocation3], %s225
          %s227 = smul.u32 2, %s28
          %s229 = ssub.s32 128, 128
          %230 = vsyncadd %s223, %s229
          %s231 = smul.addr %s27, 2
          %s232 = sadd.s32 %s227, %s231
          %s233 = smul.addr %s232, 64
          %s234 = scalar_lea.hbm %s0, %s233
          %s236 = sshll.u32 %s226, 4
          %s237 = int_to_ptr.vmem [resolvable:$true] %s236
          %239 = dma.hbm_to_vmem [thread:$0]  %s234, 128, %s237, %s223
        $region28: #{tpu_custom_call.1} parent=23 // pred_fallthru
          _
        // Predicated region
        $region29: #{tpu_custom_call.1} parent=23 // pred_check
          %p240 = pneg %p82
        $region30: #{tpu_custom_call.1} parent=23 // pred_check_branch
          %242 = sbr.rel (%p240) target = $region32
        $region31: #{tpu_custom_call.1} parent=23 // pred_region
          %s243 = sand.u32 %s20, 1
          %s244 = scalar_lea.sflag [#allocation7], %s243
          %s245 = sand.u32 %s72, 1
          %s246 = smul.addr %s245, 4
          %s247 = scalar_lea.vmem [#allocation6], %s246
          %s249 = ssub.s32 64, 64
          %250 = vsyncadd %s244, %s249
          %s251 = sadd.s32 %s28, %s27
          %s252 = smul.addr %s251, 64
          %s253 = scalar_lea.hbm %s1, %s252
          %s255 = sshll.u32 %s247, 4
          %s256 = int_to_ptr.vmem [resolvable:$true] %s255
          %258 = dma.hbm_to_vmem [thread:$0]  %s253, 64, %s256, %s244
        $region32: #{tpu_custom_call.1} parent=23 // pred_fallthru
          _
        // Predicated region
        $region33: #{tpu_custom_call.1} parent=23 // pred_check
          %p259 = pneg %p110
        $region34: #{tpu_custom_call.1} parent=23 // pred_check_branch
          %261 = sbr.rel (%p259) target = $region36
        $region35: #{tpu_custom_call.1} parent=23 // pred_region
          %p262 = scmp.lt.s32.totalorder %s27, 1
          %s263 = scalar_select %p262, %s27, 1
          %p264 = scmp.lt.s32.totalorder %s28, 0
          %s265 = scalar_select %p264, %s28, 0
          %s266 = sadd.s32 %s265, %s263
          %s267 = smul.addr %s266, 4
          %s268 = scalar_lea.vmem %s2, %s267
        $region36: #{tpu_custom_call.1} parent=23 // pred_fallthru
          _
      $region24: #{tpu_custom_call.1} parent=5 // pred_fallthru
        _
      %p269 = scmp.le.s32.totalorder 1, %s20
      %p270 = scmp.lt.s32.totalorder %s20, 3
      %p271 = pnand %p269, %p270
      %p272 = pneg %p271
      // Predicated region
      $region37: #{tpu_custom_call.1} parent=5 // pred_check
        _
      $region38: #{tpu_custom_call.1} parent=5 // pred_check_branch
        %274 = sbr.rel (%p271) target = $region40
      $region39: #{tpu_custom_call.1} parent=5 // pred_region
        %s275 = ssub.s32 %s20, 1
        %s276 = sand.u32 %s47, 1
        %s277 = scalar_lea.sflag [#allocation4], %s276
        %s278 = sand.u32 %s47, 1
        %s279 = smul.addr %s278, 8
        %s280 = scalar_lea.vmem [#allocation3], %s279
        // Predicated region
        $region41: #{tpu_custom_call.1} parent=39 // pred_check
          %p281 = pneg %p60
        $region42: #{tpu_custom_call.1} parent=39 // pred_check_branch
          %283 = sbr.rel (%p281) target = $region44
        $region43: #{tpu_custom_call.1} parent=39 // pred_region
          %284 = dma.done %s277, 128
        $region44: #{tpu_custom_call.1} parent=39 // pred_fallthru
          _
        %s285 = sand.u32 %s25, 1
        %s286 = scalar_lea.sflag [#allocation7], %s285
        %s287 = sand.u32 %s75, 1
        %s288 = smul.addr %s287, 4
        %s289 = scalar_lea.vmem [#allocation6], %s288
        // Predicated region
        $region45: #{tpu_custom_call.1} parent=39 // pred_check
          %p290 = pneg %p88
        $region46: #{tpu_custom_call.1} parent=39 // pred_check_branch
          %292 = sbr.rel (%p290) target = $region48
        $region47: #{tpu_custom_call.1} parent=39 // pred_region
          %293 = dma.done %s286, 64
        $region48: #{tpu_custom_call.1} parent=39 // pred_fallthru
          _
        // Predicated region
        $region49: #{tpu_custom_call.1} parent=39 // pred_check
          %p294 = pneg %p137
        $region50: #{tpu_custom_call.1} parent=39 // pred_check_branch
          %296 = sbr.rel (%p294) target = $region52
        $region51: #{tpu_custom_call.1} parent=39 // pred_region
          %297 = dma.done [#allocation7], 64
        $region52: #{tpu_custom_call.1} parent=39 // pred_fallthru
          _
        %s298 = sand.u32 %s47, 1
        %s299 = scalar_lea.sflag [#allocation4], %s298
        %s300 = sand.u32 %s47, 1
        %s301 = smul.addr %s300, 8
        %s302 = scalar_lea.vmem [#allocation3], %s301
        %p303 = pneg %p60
        %p304 = pneg %p57
        %s305 = sand.u32 %s25, 1
        %s306 = scalar_lea.sflag [#allocation7], %s305
        %s307 = sand.u32 %s75, 1
        %s308 = smul.addr %s307, 4
        %s309 = scalar_lea.vmem [#allocation6], %s308
        %p310 = pneg %p88
        %p311 = pneg %p85
        %p312 = scmp.lt.s32.totalorder %s29, 1
        %s313 = scalar_select %p312, %s29, 1
        %p314 = scmp.lt.s32.totalorder %s30, 0
        %s315 = scalar_select %p314, %s30, 0
        %s316 = sadd.s32 %s315, %s313
        %s317 = smul.addr %s316, 4
        %s318 = scalar_lea.vmem %s2, %s317
        %p319 = pneg %p116
        %p320 = pneg %p113
        %p321 = pneg %p137
        %p322 = pneg %p134
        %p323 = pneg %p158
        %p324 = pneg %p155
        %p325 = pneg %p186
        %p326 = pneg %p183
        %s327 = sand.u32 %s173, 1
        %s328 = scalar_lea.sflag [#allocation5], %s327
        %s329 = sand.u32 %s173, 1
        %s330 = smul.addr %s329, 16
        %s331 = scalar_lea.vmem [#allocation9], %s330
        %s332 = smul.u32 2, %s30
        %p333 = scmp.lt.s32.totalorder %s29, 1
        %s334 = scalar_select %p333, %s29, 1
        %p335 = scmp.lt.s32.totalorder %s30, 0
        %s336 = scalar_select %p335, %s30, 0
        %s337 = sadd.s32 %s336, %s334
        %s338 = smul.addr %s337, 4
        %s339 = scalar_lea.vmem %s2, %s338
        %s340 = smul.u32 2, %s30
        %v341 = vld [vmem:[%s280] sm:$0xff]
        %v343 = vcombine.high %v341, %v341
        %345 = vst [vmem:[%s331] sm:$0xf] %v341
        %346 = vst [vmem:[%s331 + $0x8] sm:$0xf] %v343
        %v347 = vld [vmem:[%s289] sm:$0xf]
        %349 = vrot.lane.b32.xlu0 %v347, 112
        %v350 = vpop.permute.xlu0 %349
        %vm352 = vcmask 1044352
        %353 = vst.msk [vmem:[#allocation2] sm:$0xf] %vm352, %v350
        %354 = vst [vmem:[#allocation2 + $0x4] sm:$0xff] %v341
        %v355 = vld [vmem:[%s339] sm:$0xf]
        %vm356 = vcmask 125952
        %357 = vst.msk [vmem:[#allocation2 + $0xc] sm:$0xf] %vm356, %v355
        %v358 = vlaneseq
        %v359 = vand.u32 %v358, 127
        %v360 = vadd.s32 %v359, 128
        %vm361 = vcmp.lt.s32.totalorder %v359, 0
        %v362 = vsub.s32 0, %v359
        %v363 = vsel %vm361, %v362, %v359
        %v364 = vshrl.u32 %v363, 4
        %v365 = vand.u32 %v363, 15
        %v366 = vsub.s32 0, %v365
        %v367 = vsel %vm361, %v366, %v365
        %vm368 = vcmp.lt.s32.totalorder %v360, 0
        %v369 = vsub.s32 0, %v360
        %v370 = vsel %vm368, %v369, %v360
        %v371 = vshrl.u32 %v370, 4
        %v372 = vand.u32 %v370, 15
        %v373 = vsub.s32 0, %v372
        %v374 = vsel %vm368, %v373, %v372
        %vm375 = vcmp.ne.s32.totalorder %v367, 0
        %vm376 = vcmp.ne.s32.totalorder %v374, 0
        %vm377 = vcmp.lt.s32.totalorder %v367, 0
        %vm378 = vcmp.lt.s32.totalorder %v374, 0
        %vm379 = vmand %vm377, %vm375
        %vm380 = vmand %vm378, %vm376
        %v381 = vadd.s32 %v367, 16
        %v382 = vadd.s32 %v374, 16
        %v383 = vsel %vm379, %v381, %v367
        %v384 = vsel %vm380, %v382, %v374
        %vm385 = vcmp.eq.s32.totalorder %v383, 0
        %vm386 = vcmp.eq.s32.totalorder %v384, 0
        %vm387 = vcmp.eq.s32.totalorder %v383, 15
        %vm388 = vcmp.eq.s32.totalorder %v384, 15
        %v389 = vld [vmem:[#allocation2] sm:$0xff]
        %v390 = vld [vmem:[#allocation2 + $0x8] sm:$0xf]
        %v391 = vsel %vm385, 1, 0
        %v392 = vsel %vm386, 1, 0
        %vm393 = vcmp.eq.s32.totalorder %v391, 1
        %vm394 = vcmp.eq.s32.totalorder %v392, 1
        %v397 = vcombine.high %v389, %v389
        %398 = vrot.lane.b32.xlu0 %v389, 17
        %v399 = vpop.permute.xlu0 %398
        %400 = vrot.lane.b32.xlu0 %v397, 17
        %v401 = vpop.permute.xlu0 %400
        %402 = vrot.lane.b32.xlu0 %v390, 17
        %v403 = vpop.permute.xlu0 %402
        %vm404 = vcmask 138240
        %v405 = vsel %vm404, %v399, %v401
        %v406 = vsel %vm404, %v401, %v403
        %v409 = vsel %vm393, 0.0, %v405
        %v410 = vsel %vm394, 0.0, %v406
        %v411 = vld [vmem:[#allocation8] sm:$0xf]
        %413 = vrot.lane.b32.xlu0 %v411, 124
        %v414 = vpop.permute.xlu0 %413
        %415 = vrot.lane.b32.xlu0 %v389, 16
        %v416 = vpop.permute.xlu0 %415
        %417 = vrot.lane.b32.xlu0 %v397, 16
        %v418 = vpop.permute.xlu0 %417
        %419 = vrot.lane.b32.xlu0 %v390, 16
        %v420 = vpop.permute.xlu0 %419
        %vm421 = vcmask 130048
        %v422 = vsel %vm421, %v416, %v418
        %v423 = vsel %vm421, %v418, %v420
        %vm424 = vcmask 31744
        %v425 = vsel %vm424, %v414, 0
        %vm427 = vcmask 1043456
        %v428 = vsel %vm427, %v422, 0
        %v430 = vsel %vm427, %v423, 0
        %432 = vmatprep.subr.mxu0 0.0
        %433 = vmatpush1.msra.mxu0 0.0
        %434 = vmatprep.subr.mxu0 0.0
        %435 = vmatpush1.msra.mxu0 0.0
        %436 = vmatprep.subr.mxu0 0.0
        %437 = vmatpush1.msra.mxu0 0.0
        %438 = vmatprep.subr.mxu0 0.0
        %439 = vmatpush1.msra.mxu0 0.0
        %440 = vmatprep.subr.mxu0 0.0
        %441 = vmatpush1.msra.mxu0 0.0
        %442 = vmatprep.subr.mxu0 0.0
        %443 = vmatpush1.msra.mxu0 0.0
        %444 = vmatprep.subr.mxu0 0.0
        %445 = vmatpush1.msra.mxu0 0.0
        %446 = vmatprep.subr.mxu0 0.0
        %447 = vmatpush1.msra.mxu0 0.0
        %448 = vmatprep.subr.mxu0 0.0
        %449 = vmatpush1.msra.mxu0 0.0
        %450 = vmatprep.subr.mxu0 0.0
        %451 = vmatpush1.msra.mxu0 0.0
        %452 = vmatprep.subr.mxu0 0.0
        %453 = vmatpush1.msra.mxu0 0.0
        %454 = vmatprep.subr.mxu0 0.0
        %455 = vmatpush1.msra.mxu0 0.0
        %456 = vmatprep.subr.mxu0 0.0
        %457 = vmatpush1.msra.mxu0 0.0
        %458 = vmatprep.subr.mxu0 0.0
        %459 = vmatpush1.msra.mxu0 0.0
        %460 = vmatprep.subr.mxu0 0.0
        %461 = vmatpush1.msra.mxu0 0.0
        %462 = vmatprep.subr.mxu0 %v430
        %463 = vmatpush1.msra.mxu0 %v428
        %464 = vmatprep.subr.mxu0 0.0
        %465 = vmatpush2.msra.mxu0 0.0
        %466 = vmatprep.subr.mxu0 0.0
        %467 = vmatpush2.msra.mxu0 0.0
        %468 = vmatprep.subr.mxu0 0.0
        %469 = vmatpush2.msra.mxu0 0.0
        %470 = vmatprep.subr.mxu0 0.0
        %471 = vmatpush2.msra.mxu0 0.0
        %472 = vmatprep.subr.mxu0 0.0
        %473 = vmatpush2.msra.mxu0 0.0
        %474 = vmatprep.subr.mxu0 0.0
        %475 = vmatpush2.msra.mxu0 0.0
        %476 = vmatprep.subr.mxu0 0.0
        %477 = vmatpush2.msra.mxu0 0.0
        %478 = vmatprep.subr.mxu0 0.0
        %479 = vmatpush2.msra.mxu0 0.0
        %480 = vmatprep.subr.mxu0 0.0
        %481 = vmatpush2.msra.mxu0 0.0
        %482 = vmatprep.subr.mxu0 0.0
        %483 = vmatpush2.msra.mxu0 0.0
        %484 = vmatprep.subr.mxu0 0.0
        %485 = vmatpush2.msra.mxu0 0.0
        %486 = vmatprep.subr.mxu0 0.0
        %487 = vmatpush2.msra.mxu0 0.0
        %488 = vmatprep.subr.mxu0 0.0
        %489 = vmatpush2.msra.mxu0 0.0
        %490 = vmatprep.subr.mxu0 0.0
        %491 = vmatpush2.msra.mxu0 0.0
        %492 = vmatprep.subr.mxu0 0.0
        %493 = vmatpush2.msra.mxu0 0.0
        %494 = vmatprep.subr.mxu0 0.0
        %495 = vmatpush2.msra.mxu0 0.0
        %496 = vmatprep.mubr.f32.mxu0 0.0
        %497 = vmatmul.mubr.f32.gmra.mxu0 %v425
        %v498 = vpop.f32.mrf.mxu0
        %v499 = vadd.f32 0.0, %v498
        %v500 = vpop.f32.mrf.mxu0
        %v501 = vadd.f32 0.0, %v500
        %502 = vdwg.mxu0
        %v503 = vsel %vm424, %v411, 0
        %v506 = vsel %vm427, %v409, 0
        %v509 = vsel %vm427, %v410, 0
        %511 = vmatprep.subr.mxu0 0.0
        %512 = vmatpush1.msra.mxu0 0.0
        %513 = vmatprep.subr.mxu0 0.0
        %514 = vmatpush1.msra.mxu0 0.0
        %515 = vmatprep.subr.mxu0 0.0
        %516 = vmatpush1.msra.mxu0 0.0
        %517 = vmatprep.subr.mxu0 0.0
        %518 = vmatpush1.msra.mxu0 0.0
        %519 = vmatprep.subr.mxu0 0.0
        %520 = vmatpush1.msra.mxu0 0.0
        %521 = vmatprep.subr.mxu0 0.0
        %522 = vmatpush1.msra.mxu0 0.0
        %523 = vmatprep.subr.mxu0 0.0
        %524 = vmatpush1.msra.mxu0 0.0
        %525 = vmatprep.subr.mxu0 0.0
        %526 = vmatpush1.msra.mxu0 0.0
        %527 = vmatprep.subr.mxu0 0.0
        %528 = vmatpush1.msra.mxu0 0.0
        %529 = vmatprep.subr.mxu0 0.0
        %530 = vmatpush1.msra.mxu0 0.0
        %531 = vmatprep.subr.mxu0 0.0
        %532 = vmatpush1.msra.mxu0 0.0
        %533 = vmatprep.subr.mxu0 0.0
        %534 = vmatpush1.msra.mxu0 0.0
        %535 = vmatprep.subr.mxu0 0.0
        %536 = vmatpush1.msra.mxu0 0.0
        %537 = vmatprep.subr.mxu0 0.0
        %538 = vmatpush1.msra.mxu0 0.0
        %539 = vmatprep.subr.mxu0 0.0
        %540 = vmatpush1.msra.mxu0 0.0
        %541 = vmatprep.subr.mxu0 %v509
        %542 = vmatpush1.msra.mxu0 %v506
        %543 = vmatprep.subr.mxu0 0.0
        %544 = vmatpush2.msra.mxu0 0.0
        %545 = vmatprep.subr.mxu0 0.0
        %546 = vmatpush2.msra.mxu0 0.0
        %547 = vmatprep.subr.mxu0 0.0
        %548 = vmatpush2.msra.mxu0 0.0
        %549 = vmatprep.subr.mxu0 0.0
        %550 = vmatpush2.msra.mxu0 0.0
        %551 = vmatprep.subr.mxu0 0.0
        %552 = vmatpush2.msra.mxu0 0.0
        %553 = vmatprep.subr.mxu0 0.0
        %554 = vmatpush2.msra.mxu0 0.0
        %555 = vmatprep.subr.mxu0 0.0
        %556 = vmatpush2.msra.mxu0 0.0
        %557 = vmatprep.subr.mxu0 0.0
        %558 = vmatpush2.msra.mxu0 0.0
        %559 = vmatprep.subr.mxu0 0.0
        %560 = vmatpush2.msra.mxu0 0.0
        %561 = vmatprep.subr.mxu0 0.0
        %562 = vmatpush2.msra.mxu0 0.0
        %563 = vmatprep.subr.mxu0 0.0
        %564 = vmatpush2.msra.mxu0 0.0
        %565 = vmatprep.subr.mxu0 0.0
        %566 = vmatpush2.msra.mxu0 0.0
        %567 = vmatprep.subr.mxu0 0.0
        %568 = vmatpush2.msra.mxu0 0.0
        %569 = vmatprep.subr.mxu0 0.0
        %570 = vmatpush2.msra.mxu0 0.0
        %571 = vmatprep.subr.mxu0 0.0
        %572 = vmatpush2.msra.mxu0 0.0
        %573 = vmatprep.subr.mxu0 0.0
        %574 = vmatpush2.msra.mxu0 0.0
        %575 = vmatprep.mubr.f32.mxu0 0.0
        %576 = vmatmul.mubr.f32.gmra.mxu0 %v503
        %v577 = vpop.f32.mrf.mxu0
        %v578 = vadd.f32 %v499, %v577
        %v579 = vpop.f32.mrf.mxu0
        %v580 = vadd.f32 %v501, %v579
        %581 = vdwg.mxu0
        %v582 = vld [vmem:[#allocation2] sm:$0xff]
        %v583 = vld [vmem:[#allocation2 + $0x8] sm:$0xf]
        %v584 = vsel %vm387, 1, 0
        %v585 = vsel %vm388, 1, 0
        %vm586 = vcmp.eq.s32.totalorder %v584, 1
        %vm587 = vcmp.eq.s32.totalorder %v585, 1
        %v590 = vcombine.high %v582, %v582
        %591 = vrot.lane.b32.xlu0 %v582, 15
        %v592 = vpop.permute.xlu0 %591
        %593 = vrot.lane.b32.xlu0 %v590, 15
        %v594 = vpop.permute.xlu0 %593
        %595 = vrot.lane.b32.xlu0 %v583, 15
        %v596 = vpop.permute.xlu0 %595
        %vm597 = vcmask 121856
        %v598 = vsel %vm597, %v592, %v594
        %v599 = vsel %vm597, %v594, %v596
        %v602 = vsel %vm586, 0.0, %v598
        %v603 = vsel %vm587, 0.0, %v599
        %v604 = vld [vmem:[#allocation8] sm:$0xf]
        %606 = vrot.lane.b32.xlu0 %v604, 120
        %v607 = vpop.permute.xlu0 %606
        %v608 = vsel %vm424, %v607, 0
        %v611 = vsel %vm427, %v602, 0
        %v614 = vsel %vm427, %v603, 0
        %616 = vmatprep.subr.mxu0 0.0
        %617 = vmatpush1.msra.mxu0 0.0
        %618 = vmatprep.subr.mxu0 0.0
        %619 = vmatpush1.msra.mxu0 0.0
        %620 = vmatprep.subr.mxu0 0.0
        %621 = vmatpush1.msra.mxu0 0.0
        %622 = vmatprep.subr.mxu0 0.0
        %623 = vmatpush1.msra.mxu0 0.0
        %624 = vmatprep.subr.mxu0 0.0
        %625 = vmatpush1.msra.mxu0 0.0
        %626 = vmatprep.subr.mxu0 0.0
        %627 = vmatpush1.msra.mxu0 0.0
        %628 = vmatprep.subr.mxu0 0.0
        %629 = vmatpush1.msra.mxu0 0.0
        %630 = vmatprep.subr.mxu0 0.0
        %631 = vmatpush1.msra.mxu0 0.0
        %632 = vmatprep.subr.mxu0 0.0
        %633 = vmatpush1.msra.mxu0 0.0
        %634 = vmatprep.subr.mxu0 0.0
        %635 = vmatpush1.msra.mxu0 0.0
        %636 = vmatprep.subr.mxu0 0.0
        %637 = vmatpush1.msra.mxu0 0.0
        %638 = vmatprep.subr.mxu0 0.0
        %639 = vmatpush1.msra.mxu0 0.0
        %640 = vmatprep.subr.mxu0 0.0
        %641 = vmatpush1.msra.mxu0 0.0
        %642 = vmatprep.subr.mxu0 0.0
        %643 = vmatpush1.msra.mxu0 0.0
        %644 = vmatprep.subr.mxu0 0.0
        %645 = vmatpush1.msra.mxu0 0.0
        %646 = vmatprep.subr.mxu0 %v614
        %647 = vmatpush1.msra.mxu0 %v611
        %648 = vmatprep.subr.mxu0 0.0
        %649 = vmatpush2.msra.mxu0 0.0
        %650 = vmatprep.subr.mxu0 0.0
        %651 = vmatpush2.msra.mxu0 0.0
        %652 = vmatprep.subr.mxu0 0.0
        %653 = vmatpush2.msra.mxu0 0.0
        %654 = vmatprep.subr.mxu0 0.0
        %655 = vmatpush2.msra.mxu0 0.0
        %656 = vmatprep.subr.mxu0 0.0
        %657 = vmatpush2.msra.mxu0 0.0
        %658 = vmatprep.subr.mxu0 0.0
        %659 = vmatpush2.msra.mxu0 0.0
        %660 = vmatprep.subr.mxu0 0.0
        %661 = vmatpush2.msra.mxu0 0.0
        %662 = vmatprep.subr.mxu0 0.0
        %663 = vmatpush2.msra.mxu0 0.0
        %664 = vmatprep.subr.mxu0 0.0
        %665 = vmatpush2.msra.mxu0 0.0
        %666 = vmatprep.subr.mxu0 0.0
        %667 = vmatpush2.msra.mxu0 0.0
        %668 = vmatprep.subr.mxu0 0.0
        %669 = vmatpush2.msra.mxu0 0.0
        %670 = vmatprep.subr.mxu0 0.0
        %671 = vmatpush2.msra.mxu0 0.0
        %672 = vmatprep.subr.mxu0 0.0
        %673 = vmatpush2.msra.mxu0 0.0
        %674 = vmatprep.subr.mxu0 0.0
        %675 = vmatpush2.msra.mxu0 0.0
        %676 = vmatprep.subr.mxu0 0.0
        %677 = vmatpush2.msra.mxu0 0.0
        %678 = vmatprep.subr.mxu0 0.0
        %679 = vmatpush2.msra.mxu0 0.0
        %680 = vmatprep.mubr.f32.mxu0 0.0
        %681 = vmatmul.mubr.f32.gmra.mxu0 %v608
        %v682 = vpop.f32.mrf.mxu0
        %v683 = vadd.f32 0.0, %v682
        %v684 = vpop.f32.mrf.mxu0
        %v685 = vadd.f32 0.0, %v684
        %686 = vdwg.mxu0
        %v687 = vadd.f32 %v578, %v683
        %v688 = vadd.f32 %v580, %v685
        %v689 = vld [vmem:[#allocation2] sm:$0xff]
        %v690 = vld [vmem:[#allocation2 + $0x8] sm:$0xf]
        %v693 = vcombine.high %v689, %v689
        %694 = vrot.lane.b32.xlu0 %v689, 1
        %v695 = vpop.permute.xlu0 %694
        %696 = vrot.lane.b32.xlu0 %v693, 1
        %v697 = vpop.permute.xlu0 %696
        %698 = vrot.lane.b32.xlu0 %v690, 1
        %v699 = vpop.permute.xlu0 %698
        %vm700 = vcmask 7168
        %v701 = vsel %vm700, %v695, %v697
        %v702 = vsel %vm700, %v697, %v699
        %v705 = vsel %vm393, 0.0, %v701
        %v706 = vsel %vm394, 0.0, %v702
        %v707 = vld [vmem:[#allocation8] sm:$0xf]
        %709 = vrot.lane.b32.xlu0 %v707, 116
        %v710 = vpop.permute.xlu0 %709
        %v711 = vsel %vm424, %v710, 0
        %v714 = vsel %vm427, %v705, 0
        %v717 = vsel %vm427, %v706, 0
        %719 = vmatprep.subr.mxu0 0.0
        %720 = vmatpush1.msra.mxu0 0.0
        %721 = vmatprep.subr.mxu0 0.0
        %722 = vmatpush1.msra.mxu0 0.0
        %723 = vmatprep.subr.mxu0 0.0
        %724 = vmatpush1.msra.mxu0 0.0
        %725 = vmatprep.subr.mxu0 0.0
        %726 = vmatpush1.msra.mxu0 0.0
        %727 = vmatprep.subr.mxu0 0.0
        %728 = vmatpush1.msra.mxu0 0.0
        %729 = vmatprep.subr.mxu0 0.0
        %730 = vmatpush1.msra.mxu0 0.0
        %731 = vmatprep.subr.mxu0 0.0
        %732 = vmatpush1.msra.mxu0 0.0
        %733 = vmatprep.subr.mxu0 0.0
        %734 = vmatpush1.msra.mxu0 0.0
        %735 = vmatprep.subr.mxu0 0.0
        %736 = vmatpush1.msra.mxu0 0.0
        %737 = vmatprep.subr.mxu0 0.0
        %738 = vmatpush1.msra.mxu0 0.0
        %739 = vmatprep.subr.mxu0 0.0
        %740 = vmatpush1.msra.mxu0 0.0
        %741 = vmatprep.subr.mxu0 0.0
        %742 = vmatpush1.msra.mxu0 0.0
        %743 = vmatprep.subr.mxu0 0.0
        %744 = vmatpush1.msra.mxu0 0.0
        %745 = vmatprep.subr.mxu0 0.0
        %746 = vmatpush1.msra.mxu0 0.0
        %747 = vmatprep.subr.mxu0 0.0
        %748 = vmatpush1.msra.mxu0 0.0
        %749 = vmatprep.subr.mxu0 %v717
        %750 = vmatpush1.msra.mxu0 %v714
        %751 = vmatprep.subr.mxu0 0.0
        %752 = vmatpush2.msra.mxu0 0.0
        %753 = vmatprep.subr.mxu0 0.0
        %754 = vmatpush2.msra.mxu0 0.0
        %755 = vmatprep.subr.mxu0 0.0
        %756 = vmatpush2.msra.mxu0 0.0
        %757 = vmatprep.subr.mxu0 0.0
        %758 = vmatpush2.msra.mxu0 0.0
        %759 = vmatprep.subr.mxu0 0.0
        %760 = vmatpush2.msra.mxu0 0.0
        %761 = vmatprep.subr.mxu0 0.0
        %762 = vmatpush2.msra.mxu0 0.0
        %763 = vmatprep.subr.mxu0 0.0
        %764 = vmatpush2.msra.mxu0 0.0
        %765 = vmatprep.subr.mxu0 0.0
        %766 = vmatpush2.msra.mxu0 0.0
        %767 = vmatprep.subr.mxu0 0.0
        %768 = vmatpush2.msra.mxu0 0.0
        %769 = vmatprep.subr.mxu0 0.0
        %770 = vmatpush2.msra.mxu0 0.0
        %771 = vmatprep.subr.mxu0 0.0
        %772 = vmatpush2.msra.mxu0 0.0
        %773 = vmatprep.subr.mxu0 0.0
        %774 = vmatpush2.msra.mxu0 0.0
        %775 = vmatprep.subr.mxu0 0.0
        %776 = vmatpush2.msra.mxu0 0.0
        %777 = vmatprep.subr.mxu0 0.0
        %778 = vmatpush2.msra.mxu0 0.0
        %779 = vmatprep.subr.mxu0 0.0
        %780 = vmatpush2.msra.mxu0 0.0
        %781 = vmatprep.subr.mxu0 0.0
        %782 = vmatpush2.msra.mxu0 0.0
        %783 = vmatprep.mubr.f32.mxu0 0.0
        %784 = vmatmul.mubr.f32.gmra.mxu0 %v711
        %v785 = vpop.f32.mrf.mxu0
        %v786 = vadd.f32 0.0, %v785
        %v787 = vpop.f32.mrf.mxu0
        %v788 = vadd.f32 0.0, %v787
        %789 = vdwg.mxu0
        %v790 = vadd.f32 %v687, %v786
        %v791 = vadd.f32 %v688, %v788
        %v792 = vld [vmem:[#allocation2 + $0x4] sm:$0xff]
        %793 = vrot.lane.b32.xlu0 %v707, 112
        %v794 = vpop.permute.xlu0 %793
        %v796 = vcombine.high %v792, %v792
        %v797 = vsel %vm424, %v794, 0
        %v799 = vsel %vm427, %v792, 0
        %v801 = vsel %vm427, %v796, 0
        %803 = vmatprep.subr.mxu0 0.0
        %804 = vmatpush1.msra.mxu0 0.0
        %805 = vmatprep.subr.mxu0 0.0
        %806 = vmatpush1.msra.mxu0 0.0
        %807 = vmatprep.subr.mxu0 0.0
        %808 = vmatpush1.msra.mxu0 0.0
        %809 = vmatprep.subr.mxu0 0.0
        %810 = vmatpush1.msra.mxu0 0.0
        %811 = vmatprep.subr.mxu0 0.0
        %812 = vmatpush1.msra.mxu0 0.0
        %813 = vmatprep.subr.mxu0 0.0
        %814 = vmatpush1.msra.mxu0 0.0
        %815 = vmatprep.subr.mxu0 0.0
        %816 = vmatpush1.msra.mxu0 0.0
        %817 = vmatprep.subr.mxu0 0.0
        %818 = vmatpush1.msra.mxu0 0.0
        %819 = vmatprep.subr.mxu0 0.0
        %820 = vmatpush1.msra.mxu0 0.0
        %821 = vmatprep.subr.mxu0 0.0
        %822 = vmatpush1.msra.mxu0 0.0
        %823 = vmatprep.subr.mxu0 0.0
        %824 = vmatpush1.msra.mxu0 0.0
        %825 = vmatprep.subr.mxu0 0.0
        %826 = vmatpush1.msra.mxu0 0.0
        %827 = vmatprep.subr.mxu0 0.0
        %828 = vmatpush1.msra.mxu0 0.0
        %829 = vmatprep.subr.mxu0 0.0
        %830 = vmatpush1.msra.mxu0 0.0
        %831 = vmatprep.subr.mxu0 0.0
        %832 = vmatpush1.msra.mxu0 0.0
        %833 = vmatprep.subr.mxu0 %v801
        %834 = vmatpush1.msra.mxu0 %v799
        %835 = vmatprep.subr.mxu0 0.0
        %836 = vmatpush2.msra.mxu0 0.0
        %837 = vmatprep.subr.mxu0 0.0
        %838 = vmatpush2.msra.mxu0 0.0
        %839 = vmatprep.subr.mxu0 0.0
        %840 = vmatpush2.msra.mxu0 0.0
        %841 = vmatprep.subr.mxu0 0.0
        %842 = vmatpush2.msra.mxu0 0.0
        %843 = vmatprep.subr.mxu0 0.0
        %844 = vmatpush2.msra.mxu0 0.0
        %845 = vmatprep.subr.mxu0 0.0
        %846 = vmatpush2.msra.mxu0 0.0
        %847 = vmatprep.subr.mxu0 0.0
        %848 = vmatpush2.msra.mxu0 0.0
        %849 = vmatprep.subr.mxu0 0.0
        %850 = vmatpush2.msra.mxu0 0.0
        %851 = vmatprep.subr.mxu0 0.0
        %852 = vmatpush2.msra.mxu0 0.0
        %853 = vmatprep.subr.mxu0 0.0
        %854 = vmatpush2.msra.mxu0 0.0
        %855 = vmatprep.subr.mxu0 0.0
        %856 = vmatpush2.msra.mxu0 0.0
        %857 = vmatprep.subr.mxu0 0.0
        %858 = vmatpush2.msra.mxu0 0.0
        %859 = vmatprep.subr.mxu0 0.0
        %860 = vmatpush2.msra.mxu0 0.0
        %861 = vmatprep.subr.mxu0 0.0
        %862 = vmatpush2.msra.mxu0 0.0
        %863 = vmatprep.subr.mxu0 0.0
        %864 = vmatpush2.msra.mxu0 0.0
        %865 = vmatprep.subr.mxu0 0.0
        %866 = vmatpush2.msra.mxu0 0.0
        %867 = vmatprep.mubr.f32.mxu0 0.0
        %868 = vmatmul.mubr.f32.gmra.mxu0 %v797
        %v869 = vpop.f32.mrf.mxu0
        %v870 = vadd.f32 0.0, %v869
        %v871 = vpop.f32.mrf.mxu0
        %v872 = vadd.f32 0.0, %v871
        %873 = vdwg.mxu0
        %v874 = vadd.f32 %v790, %v870
        %v875 = vadd.f32 %v791, %v872
        %v876 = vld [vmem:[#allocation2 + $0x4] sm:$0xff]
        %v877 = vld [vmem:[#allocation2 + $0xc] sm:$0xf]
        %v880 = vcombine.high %v876, %v876
        %881 = vrot.lane.b32.xlu0 %v876, 127
        %v882 = vpop.permute.xlu0 %881
        %883 = vrot.lane.b32.xlu0 %v880, 127
        %v884 = vpop.permute.xlu0 %883
        %885 = vrot.lane.b32.xlu0 %v877, 127
        %v886 = vpop.permute.xlu0 %885
        %vm887 = vcmask 1039360
        %v888 = vsel %vm887, %v882, %v884
        %v889 = vsel %vm887, %v884, %v886
        %v892 = vsel %vm586, 0.0, %v888
        %v893 = vsel %vm587, 0.0, %v889
        %v894 = vld [vmem:[#allocation8] sm:$0xf]
        %896 = vrot.lane.b32.xlu0 %v894, 108
        %v897 = vpop.permute.xlu0 %896
        %v898 = vsel %vm424, %v897, 0
        %v901 = vsel %vm427, %v892, 0
        %v904 = vsel %vm427, %v893, 0
        %906 = vmatprep.subr.mxu0 0.0
        %907 = vmatpush1.msra.mxu0 0.0
        %908 = vmatprep.subr.mxu0 0.0
        %909 = vmatpush1.msra.mxu0 0.0
        %910 = vmatprep.subr.mxu0 0.0
        %911 = vmatpush1.msra.mxu0 0.0
        %912 = vmatprep.subr.mxu0 0.0
        %913 = vmatpush1.msra.mxu0 0.0
        %914 = vmatprep.subr.mxu0 0.0
        %915 = vmatpush1.msra.mxu0 0.0
        %916 = vmatprep.subr.mxu0 0.0
        %917 = vmatpush1.msra.mxu0 0.0
        %918 = vmatprep.subr.mxu0 0.0
        %919 = vmatpush1.msra.mxu0 0.0
        %920 = vmatprep.subr.mxu0 0.0
        %921 = vmatpush1.msra.mxu0 0.0
        %922 = vmatprep.subr.mxu0 0.0
        %923 = vmatpush1.msra.mxu0 0.0
        %924 = vmatprep.subr.mxu0 0.0
        %925 = vmatpush1.msra.mxu0 0.0
        %926 = vmatprep.subr.mxu0 0.0
        %927 = vmatpush1.msra.mxu0 0.0
        %928 = vmatprep.subr.mxu0 0.0
        %929 = vmatpush1.msra.mxu0 0.0
        %930 = vmatprep.subr.mxu0 0.0
        %931 = vmatpush1.msra.mxu0 0.0
        %932 = vmatprep.subr.mxu0 0.0
        %933 = vmatpush1.msra.mxu0 0.0
        %934 = vmatprep.subr.mxu0 0.0
        %935 = vmatpush1.msra.mxu0 0.0
        %936 = vmatprep.subr.mxu0 %v904
        %937 = vmatpush1.msra.mxu0 %v901
        %938 = vmatprep.subr.mxu0 0.0
        %939 = vmatpush2.msra.mxu0 0.0
        %940 = vmatprep.subr.mxu0 0.0
        %941 = vmatpush2.msra.mxu0 0.0
        %942 = vmatprep.subr.mxu0 0.0
        %943 = vmatpush2.msra.mxu0 0.0
        %944 = vmatprep.subr.mxu0 0.0
        %945 = vmatpush2.msra.mxu0 0.0
        %946 = vmatprep.subr.mxu0 0.0
        %947 = vmatpush2.msra.mxu0 0.0
        %948 = vmatprep.subr.mxu0 0.0
        %949 = vmatpush2.msra.mxu0 0.0
        %950 = vmatprep.subr.mxu0 0.0
        %951 = vmatpush2.msra.mxu0 0.0
        %952 = vmatprep.subr.mxu0 0.0
        %953 = vmatpush2.msra.mxu0 0.0
        %954 = vmatprep.subr.mxu0 0.0
        %955 = vmatpush2.msra.mxu0 0.0
        %956 = vmatprep.subr.mxu0 0.0
        %957 = vmatpush2.msra.mxu0 0.0
        %958 = vmatprep.subr.mxu0 0.0
        %959 = vmatpush2.msra.mxu0 0.0
        %960 = vmatprep.subr.mxu0 0.0
        %961 = vmatpush2.msra.mxu0 0.0
        %962 = vmatprep.subr.mxu0 0.0
        %963 = vmatpush2.msra.mxu0 0.0
        %964 = vmatprep.subr.mxu0 0.0
        %965 = vmatpush2.msra.mxu0 0.0
        %966 = vmatprep.subr.mxu0 0.0
        %967 = vmatpush2.msra.mxu0 0.0
        %968 = vmatprep.subr.mxu0 0.0
        %969 = vmatpush2.msra.mxu0 0.0
        %970 = vmatprep.mubr.f32.mxu0 0.0
        %971 = vmatmul.mubr.f32.gmra.mxu0 %v898
        %v972 = vpop.f32.mrf.mxu0
        %v973 = vadd.f32 0.0, %v972
        %v974 = vpop.f32.mrf.mxu0
        %v975 = vadd.f32 0.0, %v974
        %976 = vdwg.mxu0
        %v977 = vadd.f32 %v874, %v973
        %v978 = vadd.f32 %v875, %v975
        %v979 = vld [vmem:[#allocation2 + $0x4] sm:$0xff]
        %v980 = vld [vmem:[#allocation2 + $0xc] sm:$0xf]
        %v983 = vcombine.high %v979, %v979
        %984 = vrot.lane.b32.xlu0 %v979, 113
        %v985 = vpop.permute.xlu0 %984
        %986 = vrot.lane.b32.xlu0 %v983, 113
        %v987 = vpop.permute.xlu0 %986
        %988 = vrot.lane.b32.xlu0 %v980, 113
        %v989 = vpop.permute.xlu0 %988
        %vm990 = vcmask 924672
        %v991 = vsel %vm990, %v985, %v987
        %v992 = vsel %vm990, %v987, %v989
        %v995 = vsel %vm393, 0.0, %v991
        %v996 = vsel %vm394, 0.0, %v992
        %v997 = vld [vmem:[#allocation8] sm:$0xf]
        %999 = vrot.lane.b32.xlu0 %v997, 104
        %v1000 = vpop.permute.xlu0 %999
        %v1001 = vsel %vm424, %v1000, 0
        %v1004 = vsel %vm427, %v995, 0
        %v1007 = vsel %vm427, %v996, 0
        %1009 = vmatprep.subr.mxu0 0.0
        %1010 = vmatpush1.msra.mxu0 0.0
        %1011 = vmatprep.subr.mxu0 0.0
        %1012 = vmatpush1.msra.mxu0 0.0
        %1013 = vmatprep.subr.mxu0 0.0
        %1014 = vmatpush1.msra.mxu0 0.0
        %1015 = vmatprep.subr.mxu0 0.0
        %1016 = vmatpush1.msra.mxu0 0.0
        %1017 = vmatprep.subr.mxu0 0.0
        %1018 = vmatpush1.msra.mxu0 0.0
        %1019 = vmatprep.subr.mxu0 0.0
        %1020 = vmatpush1.msra.mxu0 0.0
        %1021 = vmatprep.subr.mxu0 0.0
        %1022 = vmatpush1.msra.mxu0 0.0
        %1023 = vmatprep.subr.mxu0 0.0
        %1024 = vmatpush1.msra.mxu0 0.0
        %1025 = vmatprep.subr.mxu0 0.0
        %1026 = vmatpush1.msra.mxu0 0.0
        %1027 = vmatprep.subr.mxu0 0.0
        %1028 = vmatpush1.msra.mxu0 0.0
        %1029 = vmatprep.subr.mxu0 0.0
        %1030 = vmatpush1.msra.mxu0 0.0
        %1031 = vmatprep.subr.mxu0 0.0
        %1032 = vmatpush1.msra.mxu0 0.0
        %1033 = vmatprep.subr.mxu0 0.0
        %1034 = vmatpush1.msra.mxu0 0.0
        %1035 = vmatprep.subr.mxu0 0.0
        %1036 = vmatpush1.msra.mxu0 0.0
        %1037 = vmatprep.subr.mxu0 0.0
        %1038 = vmatpush1.msra.mxu0 0.0
        %1039 = vmatprep.subr.mxu0 %v1007
        %1040 = vmatpush1.msra.mxu0 %v1004
        %1041 = vmatprep.subr.mxu0 0.0
        %1042 = vmatpush2.msra.mxu0 0.0
        %1043 = vmatprep.subr.mxu0 0.0
        %1044 = vmatpush2.msra.mxu0 0.0
        %1045 = vmatprep.subr.mxu0 0.0
        %1046 = vmatpush2.msra.mxu0 0.0
        %1047 = vmatprep.subr.mxu0 0.0
        %1048 = vmatpush2.msra.mxu0 0.0
        %1049 = vmatprep.subr.mxu0 0.0
        %1050 = vmatpush2.msra.mxu0 0.0
        %1051 = vmatprep.subr.mxu0 0.0
        %1052 = vmatpush2.msra.mxu0 0.0
        %1053 = vmatprep.subr.mxu0 0.0
        %1054 = vmatpush2.msra.mxu0 0.0
        %1055 = vmatprep.subr.mxu0 0.0
        %1056 = vmatpush2.msra.mxu0 0.0
        %1057 = vmatprep.subr.mxu0 0.0
        %1058 = vmatpush2.msra.mxu0 0.0
        %1059 = vmatprep.subr.mxu0 0.0
        %1060 = vmatpush2.msra.mxu0 0.0
        %1061 = vmatprep.subr.mxu0 0.0
        %1062 = vmatpush2.msra.mxu0 0.0
        %1063 = vmatprep.subr.mxu0 0.0
        %1064 = vmatpush2.msra.mxu0 0.0
        %1065 = vmatprep.subr.mxu0 0.0
        %1066 = vmatpush2.msra.mxu0 0.0
        %1067 = vmatprep.subr.mxu0 0.0
        %1068 = vmatpush2.msra.mxu0 0.0
        %1069 = vmatprep.subr.mxu0 0.0
        %1070 = vmatpush2.msra.mxu0 0.0
        %1071 = vmatprep.subr.mxu0 0.0
        %1072 = vmatpush2.msra.mxu0 0.0
        %1073 = vmatprep.mubr.f32.mxu0 0.0
        %1074 = vmatmul.mubr.f32.gmra.mxu0 %v1001
        %v1075 = vpop.f32.mrf.mxu0
        %v1076 = vadd.f32 0.0, %v1075
        %v1077 = vpop.f32.mrf.mxu0
        %v1078 = vadd.f32 0.0, %v1077
        %1079 = vdwg.mxu0
        %v1080 = vadd.f32 %v977, %v1076
        %v1081 = vadd.f32 %v978, %v1078
        %v1082 = vld [vmem:[#allocation2 + $0x4] sm:$0xff]
        %v1083 = vld [vmem:[#allocation2 + $0xc] sm:$0xf]
        %1084 = vrot.lane.b32.xlu0 %v997, 100
        %v1085 = vpop.permute.xlu0 %1084
        %v1088 = vcombine.high %v1082, %v1082
        %1089 = vrot.lane.b32.xlu0 %v1082, 112
        %v1090 = vpop.permute.xlu0 %1089
        %1091 = vrot.lane.b32.xlu0 %v1088, 112
        %v1092 = vpop.permute.xlu0 %1091
        %1093 = vrot.lane.b32.xlu0 %v1083, 112
        %v1094 = vpop.permute.xlu0 %1093
        %vm1095 = vcmask 916480
        %v1096 = vsel %vm1095, %v1090, %v1092
        %v1097 = vsel %vm1095, %v1092, %v1094
        %v1098 = vsel %vm424, %v1085, 0
        %v1100 = vsel %vm427, %v1096, 0
        %v1102 = vsel %vm427, %v1097, 0
        %1104 = vmatprep.subr.mxu0 0.0
        %1105 = vmatpush1.msra.mxu0 0.0
        %1106 = vmatprep.subr.mxu0 0.0
        %1107 = vmatpush1.msra.mxu0 0.0
        %1108 = vmatprep.subr.mxu0 0.0
        %1109 = vmatpush1.msra.mxu0 0.0
        %1110 = vmatprep.subr.mxu0 0.0
        %1111 = vmatpush1.msra.mxu0 0.0
        %1112 = vmatprep.subr.mxu0 0.0
        %1113 = vmatpush1.msra.mxu0 0.0
        %1114 = vmatprep.subr.mxu0 0.0
        %1115 = vmatpush1.msra.mxu0 0.0
        %1116 = vmatprep.subr.mxu0 0.0
        %1117 = vmatpush1.msra.mxu0 0.0
        %1118 = vmatprep.subr.mxu0 0.0
        %1119 = vmatpush1.msra.mxu0 0.0
        %1120 = vmatprep.subr.mxu0 0.0
        %1121 = vmatpush1.msra.mxu0 0.0
        %1122 = vmatprep.subr.mxu0 0.0
        %1123 = vmatpush1.msra.mxu0 0.0
        %1124 = vmatprep.subr.mxu0 0.0
        %1125 = vmatpush1.msra.mxu0 0.0
        %1126 = vmatprep.subr.mxu0 0.0
        %1127 = vmatpush1.msra.mxu0 0.0
        %1128 = vmatprep.subr.mxu0 0.0
        %1129 = vmatpush1.msra.mxu0 0.0
        %1130 = vmatprep.subr.mxu0 0.0
        %1131 = vmatpush1.msra.mxu0 0.0
        %1132 = vmatprep.subr.mxu0 0.0
        %1133 = vmatpush1.msra.mxu0 0.0
        %1134 = vmatprep.subr.mxu0 %v1102
        %1135 = vmatpush1.msra.mxu0 %v1100
        %1136 = vmatprep.subr.mxu0 0.0
        %1137 = vmatpush2.msra.mxu0 0.0
        %1138 = vmatprep.subr.mxu0 0.0
        %1139 = vmatpush2.msra.mxu0 0.0
        %1140 = vmatprep.subr.mxu0 0.0
        %1141 = vmatpush2.msra.mxu0 0.0
        %1142 = vmatprep.subr.mxu0 0.0
        %1143 = vmatpush2.msra.mxu0 0.0
        %1144 = vmatprep.subr.mxu0 0.0
        %1145 = vmatpush2.msra.mxu0 0.0
        %1146 = vmatprep.subr.mxu0 0.0
        %1147 = vmatpush2.msra.mxu0 0.0
        %1148 = vmatprep.subr.mxu0 0.0
        %1149 = vmatpush2.msra.mxu0 0.0
        %1150 = vmatprep.subr.mxu0 0.0
        %1151 = vmatpush2.msra.mxu0 0.0
        %1152 = vmatprep.subr.mxu0 0.0
        %1153 = vmatpush2.msra.mxu0 0.0
        %1154 = vmatprep.subr.mxu0 0.0
        %1155 = vmatpush2.msra.mxu0 0.0
        %1156 = vmatprep.subr.mxu0 0.0
        %1157 = vmatpush2.msra.mxu0 0.0
        %1158 = vmatprep.subr.mxu0 0.0
        %1159 = vmatpush2.msra.mxu0 0.0
        %1160 = vmatprep.subr.mxu0 0.0
        %1161 = vmatpush2.msra.mxu0 0.0
        %1162 = vmatprep.subr.mxu0 0.0
        %1163 = vmatpush2.msra.mxu0 0.0
        %1164 = vmatprep.subr.mxu0 0.0
        %1165 = vmatpush2.msra.mxu0 0.0
        %1166 = vmatprep.subr.mxu0 0.0
        %1167 = vmatpush2.msra.mxu0 0.0
        %1168 = vmatprep.mubr.f32.mxu0 0.0
        %1169 = vmatmul.mubr.f32.gmra.mxu0 %v1098
        %v1170 = vpop.f32.mrf.mxu0
        %v1171 = vadd.f32 0.0, %v1170
        %v1172 = vpop.f32.mrf.mxu0
        %v1173 = vadd.f32 0.0, %v1172
        %1174 = vdwg.mxu0
        %v1175 = vadd.f32 %v1080, %v1171
        %v1176 = vadd.f32 %v1081, %v1173
        %v1177 = vld [vmem:[#allocation2 + $0x4] sm:$0xff]
        %v1178 = vld [vmem:[#allocation2 + $0xc] sm:$0xf]
        %v1181 = vcombine.high %v1177, %v1177
        %1182 = vrot.lane.b32.xlu0 %v1177, 111
        %v1183 = vpop.permute.xlu0 %1182
        %1184 = vrot.lane.b32.xlu0 %v1181, 111
        %v1185 = vpop.permute.xlu0 %1184
        %1186 = vrot.lane.b32.xlu0 %v1178, 111
        %v1187 = vpop.permute.xlu0 %1186
        %vm1188 = vcmask 908288
        %v1189 = vsel %vm1188, %v1183, %v1185
        %v1190 = vsel %vm1188, %v1185, %v1187
        %v1193 = vsel %vm586, 0.0, %v1189
        %v1194 = vsel %vm587, 0.0, %v1190
        %v1195 = vld [vmem:[#allocation8] sm:$0xf]
        %1197 = vrot.lane.b32.xlu0 %v1195, 96
        %v1198 = vpop.permute.xlu0 %1197
        %v1199 = vsel %vm424, %v1198, 0
        %v1202 = vsel %vm427, %v1193, 0
        %v1205 = vsel %vm427, %v1194, 0
        %1207 = vmatprep.subr.mxu0 0.0
        %1208 = vmatpush1.msra.mxu0 0.0
        %1209 = vmatprep.subr.mxu0 0.0
        %1210 = vmatpush1.msra.mxu0 0.0
        %1211 = vmatprep.subr.mxu0 0.0
        %1212 = vmatpush1.msra.mxu0 0.0
        %1213 = vmatprep.subr.mxu0 0.0
        %1214 = vmatpush1.msra.mxu0 0.0
        %1215 = vmatprep.subr.mxu0 0.0
        %1216 = vmatpush1.msra.mxu0 0.0
        %1217 = vmatprep.subr.mxu0 0.0
        %1218 = vmatpush1.msra.mxu0 0.0
        %1219 = vmatprep.subr.mxu0 0.0
        %1220 = vmatpush1.msra.mxu0 0.0
        %1221 = vmatprep.subr.mxu0 0.0
        %1222 = vmatpush1.msra.mxu0 0.0
        %1223 = vmatprep.subr.mxu0 0.0
        %1224 = vmatpush1.msra.mxu0 0.0
        %1225 = vmatprep.subr.mxu0 0.0
        %1226 = vmatpush1.msra.mxu0 0.0
        %1227 = vmatprep.subr.mxu0 0.0
        %1228 = vmatpush1.msra.mxu0 0.0
        %1229 = vmatprep.subr.mxu0 0.0
        %1230 = vmatpush1.msra.mxu0 0.0
        %1231 = vmatprep.subr.mxu0 0.0
        %1232 = vmatpush1.msra.mxu0 0.0
        %1233 = vmatprep.subr.mxu0 0.0
        %1234 = vmatpush1.msra.mxu0 0.0
        %1235 = vmatprep.subr.mxu0 0.0
        %1236 = vmatpush1.msra.mxu0 0.0
        %1237 = vmatprep.subr.mxu0 %v1205
        %1238 = vmatpush1.msra.mxu0 %v1202
        %1239 = vmatprep.subr.mxu0 0.0
        %1240 = vmatpush2.msra.mxu0 0.0
        %1241 = vmatprep.subr.mxu0 0.0
        %1242 = vmatpush2.msra.mxu0 0.0
        %1243 = vmatprep.subr.mxu0 0.0
        %1244 = vmatpush2.msra.mxu0 0.0
        %1245 = vmatprep.subr.mxu0 0.0
        %1246 = vmatpush2.msra.mxu0 0.0
        %1247 = vmatprep.subr.mxu0 0.0
        %1248 = vmatpush2.msra.mxu0 0.0
        %1249 = vmatprep.subr.mxu0 0.0
        %1250 = vmatpush2.msra.mxu0 0.0
        %1251 = vmatprep.subr.mxu0 0.0
        %1252 = vmatpush2.msra.mxu0 0.0
        %1253 = vmatprep.subr.mxu0 0.0
        %1254 = vmatpush2.msra.mxu0 0.0
        %1255 = vmatprep.subr.mxu0 0.0
        %1256 = vmatpush2.msra.mxu0 0.0
        %1257 = vmatprep.subr.mxu0 0.0
        %1258 = vmatpush2.msra.mxu0 0.0
        %1259 = vmatprep.subr.mxu0 0.0
        %1260 = vmatpush2.msra.mxu0 0.0
        %1261 = vmatprep.subr.mxu0 0.0
        %1262 = vmatpush2.msra.mxu0 0.0
        %1263 = vmatprep.subr.mxu0 0.0
        %1264 = vmatpush2.msra.mxu0 0.0
        %1265 = vmatprep.subr.mxu0 0.0
        %1266 = vmatpush2.msra.mxu0 0.0
        %1267 = vmatprep.subr.mxu0 0.0
        %1268 = vmatpush2.msra.mxu0 0.0
        %1269 = vmatprep.subr.mxu0 0.0
        %1270 = vmatpush2.msra.mxu0 0.0
        %1271 = vmatprep.mubr.f32.mxu0 0.0
        %1272 = vmatmul.mubr.f32.gmra.mxu0 %v1199
        %v1273 = vpop.f32.mrf.mxu0
        %v1274 = vadd.f32 0.0, %v1273
        %v1275 = vpop.f32.mrf.mxu0
        %v1276 = vadd.f32 0.0, %v1275
        %1277 = vdwg.mxu0
        %v1278 = vadd.f32 %v1175, %v1274
        %v1279 = vadd.f32 %v1176, %v1276
        %v1280 = vld [vmem:[%s4] sm:$0xf]
        %1282 = vset.pattern.permute.xlu0 0
        %1283 = vperm.xlu0 %1282, %v1280
        %v1284 = vpop.permute.xlu0 %1283
        %v1286 = vadd.f32 %v1278, %v1284
        %v1287 = vadd.f32 %v1279, %v1284
        %vm1288 = vcmp.gt.f32.partialorder %v1286, 0.0
        %vm1289 = vcmp.gt.f32.partialorder %v1287, 0.0
        %v1290 = vmul.f32 %v1286, 0.2
        %v1291 = vmul.f32 %v1287, 0.2
        %v1292 = vsel %vm1288, %v1286, %v1290
        %v1293 = vsel %vm1289, %v1287, %v1291
        %v1296 = vrot.slane %v1292, 4
        %v1297 = vrot.slane %v1293, 4
        %1300 = vst [vmem:[%s331] sm:$0xf0] %v1296
        %1301 = vst [vmem:[%s331 + $0x8] sm:$0xf0] %v1297
        %s1302 = sand.u32 %s173, 1
        %s1303 = scalar_lea.sflag [#allocation5], %s1302
        %s1304 = sand.u32 %s173, 1
        %s1305 = smul.addr %s1304, 16
        %s1306 = scalar_lea.vmem [#allocation9], %s1305
        // Predicated region
        $region53: #{tpu_custom_call.1} parent=39 // pred_check
          %p1307 = pneg %p183
        $region54: #{tpu_custom_call.1} parent=39 // pred_check_branch
          %1309 = sbr.rel (%p1307) target = $region56
        $region55: #{tpu_custom_call.1} parent=39 // pred_region
          %s1310 = smul.u32 2, %s30
          %s1312 = ssub.s32 256, 256
          %1313 = vsyncadd %s1303, %s1312
          %s1314 = smul.addr %s29, 2
          %s1315 = sadd.s32 %s1310, %s1314
          %s1316 = smul.addr %s1315, 128
          %s1317 = scalar_lea.hbm %s5, %s1316
          %s1319 = sshll.u32 %s1306, 4
          %s1320 = int_to_ptr.vmem [resolvable:$true] %s1319
          %1322 = dma.vmem_to_hbm [thread:$0]  %s1320, 256, %s1317, %s1303
        $region56: #{tpu_custom_call.1} parent=39 // pred_fallthru
          _
      $region40: #{tpu_custom_call.1} parent=5 // pred_fallthru
        _
      %p1323 = scmp.le.s32.totalorder 2, %s20
      // Predicated region
      $region57: #{tpu_custom_call.1} parent=5 // pred_check
        %p1324 = pneg %p1323
      $region58: #{tpu_custom_call.1} parent=5 // pred_check_branch
        %1326 = sbr.rel (%p1324) target = $region60
      $region59: #{tpu_custom_call.1} parent=5 // pred_region
        %s1327 = ssub.s32 %s20, 2
        // Predicated region
        $region61: #{tpu_custom_call.1} parent=59 // pred_check
          %p1328 = pneg %p189
        $region62: #{tpu_custom_call.1} parent=59 // pred_check_branch
          %1330 = sbr.rel (%p1328) target = $region64
        $region63: #{tpu_custom_call.1} parent=59 // pred_region
          %s1331 = sand.u32 %s174, 1
          %s1332 = scalar_lea.sflag [#allocation5], %s1331
          %s1333 = sand.u32 %s174, 1
          %s1334 = smul.addr %s1333, 16
          %s1335 = scalar_lea.vmem [#allocation9], %s1334
          %1336 = dma.done %s1332, 256
        $region64: #{tpu_custom_call.1} parent=59 // pred_fallthru
          _
      $region60: #{tpu_custom_call.1} parent=5 // pred_fallthru
        _
    $region6: #{tpu_custom_call.1} parent=1 // loop_footer
      %s24 = sadd.s32 1, %s20
    $region7: #{tpu_custom_call.1} parent=1 // loop_footer_branch
      %19 = sbr.rel target = $region3
    $region8: #{tpu_custom_call.1} parent=1 // loop_exit
      _
    %1337 = vsyncpa [#allocation4], 1
    %s1338 = scalar_lea.sflag [#allocation4], 1
    %1339 = vsyncpa %s1338, 1
    %1340 = vsyncpa [#allocation7], 1
    %s1341 = scalar_lea.sflag [#allocation7], 1
    %1342 = vsyncpa %s1341, 1
    %1343 = vsyncpa [#allocation5], 1
    %s1344 = scalar_lea.sflag [#allocation5], 1
    %1345 = vsyncpa %s1344, 1

</llo_original>
